<compile_context>
chip_gen: v7x
topology: tpu7x:2x2x1
jax: 0.10.0
libtpu: 0.0.40
codegen_flags: <defaults>
</compile_context>

<pallas_src>
import functools
from typing import Dict, List, Tuple

import jax
import jax.numpy as jnp
from jax import lax
from jax.experimental import pallas as pl
from jax.experimental.pallas import tpu as pltpu


def _round_up(x: int, m: int) -> int:
    return (x + m - 1) // m * m


# ----------------------------------------------------------------------------
# Fused kernel for one (batch, pixel-tile) block.
#   refs = (x,
#           [stage0 (w, b)]                        (only if num_conv >= 2)
#           [hidden stages s=1..  per-head (w, b)] (only if num_conv >= 3)
#           [final stage per-head (w, b)],
#           o_head0, ..., o_head{n-1})
#   x   : (C_in, TM)       channels on sublanes, pixels on lanes
#   w   : (Cin_s, Cout_s)  bf16, pre-transposed (contraction on dim 0)
#   b   : (Cout_s, 1)      f32
#   o_i : (classes_i, TM)
# ----------------------------------------------------------------------------
def _fused_sep_head_kernel(*refs, n_heads: int, n_hidden: int, head_conv: int):
    n_in = 1 + (2 + 2 * n_heads * (n_hidden - 1) if n_hidden >= 1 else 0) + 2 * n_heads
    out_refs = refs[n_in:]

    def mxdot(w_t, h_bf16):
        # (Cin, Cout) x (Cin, TM) -> (Cout, TM), bf16 MXU inputs, f32 accumulation.
        return lax.dot_general(w_t, h_bf16, (((0,), (0,)), ((), ())),
                               preferred_element_type=jnp.float32)

    h_mx = refs[0][...].astype(jnp.bfloat16)               # (C_in, TM)
    p = 1
    if n_hidden >= 1:
        # Stage 0: all heads share the same input -> one concat matmul.
        w0, b0 = refs[p][...], refs[p + 1][...]
        p += 2
        h = jnp.maximum(mxdot(w0, h_mx) + b0, 0.0)          # (n_heads*hc, TM) f32
        h_mx = h.astype(jnp.bfloat16)
        # Extra hidden stages (num_conv > 2): per-head dots, no block-diag zeros.
        for _ in range(1, n_hidden):
            parts = []
            for i in range(n_heads):
                w, b = refs[p][...], refs[p + 1][...]
                p += 2
                hi = h_mx[i * head_conv:(i + 1) * head_conv, :]
                parts.append(jnp.maximum(mxdot(w, hi) + b, 0.0))
            h_mx = jnp.concatenate(parts, axis=0).astype(jnp.bfloat16)

    # Final conv: per-head, written straight to each head's output ref.
    for i in range(n_heads):
        w, b = refs[p][...], refs[p + 1][...]
        p += 2
        hi = h_mx[i * head_conv:(i + 1) * head_conv, :] if n_hidden >= 1 else h_mx
        out_refs[i][...] = (mxdot(w, hi) + b).astype(out_refs[i].dtype)


# ----------------------------------------------------------------------------
# Parameter packing: bf16, pre-transposed to (Cin, Cout).
# ----------------------------------------------------------------------------
def _pack_params(params: Dict[str, List[Tuple[jax.Array, jax.Array]]],
                 compute_dtype=jnp.bfloat16):
    names = list(params.keys())
    n_heads = len(names)
    depths = {len(params[n]) for n in names}
    assert len(depths) == 1, "fused path requires the same num_conv for every head"
    n_stages = depths.pop()
    n_hidden = n_stages - 1
    head_conv = int(params[names[0]][0][0].shape[0]) if n_hidden >= 1 else 0

    def wt(w):  # Conv2d (cout, cin) -> packed (cin, cout), bf16, lane-dense
        return jnp.asarray(w).T.astype(compute_dtype)

    def bc(b):  # bias -> (cout, 1) f32
        return jnp.asarray(b).reshape(-1, 1).astype(jnp.float32)

    flat = []
    if n_hidden >= 1:
        flat.append(wt(jnp.concatenate([params[n][0][0] for n in names], axis=0)))
        flat.append(bc(jnp.concatenate([params[n][0][1] for n in names], axis=0)))
        for s in range(1, n_hidden):
            for n in names:
                w, b = params[n][s]
                assert int(w.shape[0]) == head_conv and int(w.shape[1]) == head_conv
                flat.append(wt(w))
                flat.append(bc(b))
    for n in names:
        w, b = params[n][-1]
        flat.append(wt(w))
        flat.append(bc(b))

    head_channels = [(n, int(params[n][-1][0].shape[0])) for n in names]
    return flat, head_channels, n_heads, n_hidden, head_conv


# ----------------------------------------------------------------------------
# Generation-aware VMEM budget + pixel-tile selection.
# ----------------------------------------------------------------------------
def _vmem_budget_and_limit() -> Tuple[int, int]:
    cap = 64 << 20                                   # conservative fallback (v7x per-TC)
    try:
        cap = int(pltpu.get_tpu_info().vmem_capacity_bytes)   # 128 MiB v5e/v6e, 64 MiB v7x
    except Exception:
        pass
    budget = max(8 << 20, min(cap // 4, 32 << 20))   # ~16 MiB on v7x, ~32 MiB on v5e/v6e
    limit = int(max(32 << 20, min(cap // 2, 64 << 20)))  # explicit scoped-VMEM limit
    return budget, limit


def _choose_tile(hw_lane: int, n_batch: int, c_in: int, c_mid: int, c_out: int,
                 x_itemsize: int, out_itemsize: int, param_bytes: int,
                 budget: int) -> int:
    # Bytes of VMEM actually resident per pixel of tile:
    #   2x pipelined x tile + 2x pipelined per-head outputs
    #   + f32 intermediate + its bf16 MXU copy + f32 results before the store.
    bytes_per_px = (2 * c_in * x_itemsize
                    + 2 * c_out * out_itemsize
                    + c_mid * (4 + 2)
                    + c_out * 4)
    avail = max(budget - 2 * param_bytes - (1 << 20), bytes_per_px * 128)
    tm = int(avail // bytes_per_px) // 128 * 128
    tm = int(max(128, min(tm, 8192, hw_lane)))
    # >= 2 grid steps so both v7x TensorCores (and megacore on v5e/v6e) get work.
    if n_batch * ((hw_lane + tm - 1) // tm) < 2 and hw_lane > 128:
        tm = _round_up((hw_lane + 1) // 2, 128)
    return tm


# ----------------------------------------------------------------------------
# SepHead forward: x is NCHW (PyTorch convention), any float dtype (bf16 ideal).
# ----------------------------------------------------------------------------
def sep_head_forward(
    x_nchw: jax.Array,
    params: Dict[str, List[Tuple[jax.Array, jax.Array]]],
    *,
    out_dtype=jnp.float32,
) -> Dict[str, jax.Array]:
    N, C, H, W = map(int, x_nchw.shape)
    HW = H * W

    flat_params, head_channels, n_heads, n_hidden, head_conv = _pack_params(params)
    c_out_total = sum(c for _, c in head_channels)
    c_mid = n_heads * head_conv if n_hidden >= 1 else 0
    cin_final = head_conv if n_hidden >= 1 else C

    x3 = x_nchw.reshape(N, C, HW)                    # pure reshape (channels-first)
    hw_lane = HW if HW % 128 == 0 else _round_up(HW, 128)
    if hw_lane != HW:                                # rare: BEV maps are 128-aligned
        x3 = jnp.pad(x3, ((0, 0), (0, 0), (0, hw_lane - HW)))

    x_itemsize = jnp.dtype(x3.dtype).itemsize
    out_itemsize = jnp.dtype(out_dtype).itemsize
    param_bytes = sum(int(a.size) * jnp.dtype(a.dtype).itemsize for a in flat_params)

    budget, vmem_limit = _vmem_budget_and_limit()
    tm = _choose_tile(hw_lane, N, C, c_mid, c_out_total, x_itemsize, out_itemsize,
                      param_bytes, budget)
    grid = (N, pl.cdiv(hw_lane, tm))

    const_map = lambda n, j: (0, 0)
    in_specs = [pl.BlockSpec((pl.Squeezed(), C, tm), lambda n, j: (n, 0, j))]
    in_specs += [pl.BlockSpec(tuple(a.shape), const_map) for a in flat_params]

    out_shape = tuple(jax.ShapeDtypeStruct((N, c, hw_lane), out_dtype)
                      for _, c in head_channels)
    out_specs = [pl.BlockSpec((pl.Squeezed(), c, tm), lambda n, j: (n, 0, j))
                 for _, c in head_channels]

    # Advisory cost estimate for XLA scheduling around the custom call.
    flops = 0
    if n_hidden >= 1:
        flops += 2 * C * c_mid + 2 * (n_hidden - 1) * n_heads * head_conv * head_conv
    flops += 2 * cin_final * c_out_total
    flops *= N * HW
    bytes_accessed = N * HW * (C * x_itemsize + c_out_total * out_itemsize) + param_bytes

    outs = pl.pallas_call(
        functools.partial(_fused_sep_head_kernel, n_heads=n_heads,
                          n_hidden=n_hidden, head_conv=head_conv),
        out_shape=out_shape,
        grid=grid,
        in_specs=in_specs,
        out_specs=out_specs,
        compiler_params=pltpu.CompilerParams(
            dimension_semantics=("parallel", "parallel"),
            vmem_limit_bytes=vmem_limit),
        cost_estimate=pl.CostEstimate(flops=int(flops), transcendentals=0,
                                      bytes_accessed=int(bytes_accessed)),
    )(x3, *flat_params)

    ret = {}
    for (name, c), y in zip(head_channels, outs):
        if hw_lane != HW:
            y = y[:, :, :HW]
        ret[name] = y.reshape(N, c, H, W)            # already NCHW
    return ret


# ----------------------------------------------------------------------------
# Parameter construction (kaiming-style), weights stored as Conv2d's
# (cout, cin, 1, 1) squeezed to (cout, cin).
# ----------------------------------------------------------------------------
def init_sep_head_params(
    key: jax.Array,
    in_channels: int,
    heads: Dict[str, Tuple[int, int]],
    head_conv: int,
) -> Dict[str, List[Tuple[jax.Array, jax.Array]]]:
    params = {}
    for head_name in heads:
        classes, num_conv = heads[head_name]
        layers = []
        cin = in_channels
        for _ in range(num_conv - 1):
            key, kw = jax.random.split(key)
            std = (2.0 / cin) ** 0.5                 # kaiming_normal, fan_in = cin
            w = jax.random.normal(kw, (head_conv, cin), dtype=jnp.float32) * std
            b = jnp.zeros((head_conv,), dtype=jnp.float32)
            layers.append((w, b))
            cin = head_conv
        key, kw = jax.random.split(key)
        std = (2.0 / cin) ** 0.5
        w = jax.random.normal(kw, (classes, cin), dtype=jnp.float32) * std
        b = jnp.zeros((classes,), dtype=jnp.float32)
        layers.append((w, b))
        params[head_name] = layers
    return params


# ----------------------------------------------------------------------------
# Pure-JAX reference mirroring the kernel's bf16 MXU-input rounding.
# ----------------------------------------------------------------------------
def sep_head_forward_ref(x_nchw, params):
    N, C, H, W = x_nchw.shape
    mx = lambda a: a.astype(jnp.bfloat16).astype(jnp.float32)
    ret = {}
    for name, layers in params.items():
        y = x_nchw.reshape(N, C, H * W).astype(jnp.float32)
        for idx, (w, b) in enumerate(layers):
            y = jnp.einsum("oc,ncp->nop", mx(w), mx(y),
                           preferred_element_type=jnp.float32)
            y = y + b.astype(jnp.float32)[None, :, None]
            if idx != len(layers) - 1:
                y = jnp.maximum(y, 0.0)
        ret[name] = y.reshape(N, y.shape[1], H, W)
    return ret


if __name__ == "__main__":
    # SepHead configuration consistent with CenterPoint:
    # heads = {name: (classes, num_conv)}, final_kernel=1, bn=False.
    in_channels = 8
    head_conv = 32
    heads = {"hm": (2, 2), "reg": (2, 2), "height": (1, 2), "dim": (3, 2), "rot": (2, 2)}

    key = jax.random.PRNGKey(0)
    kx, kp = jax.random.split(key)
    # Feature map stored in bf16 "upstream" -> halves the dominant HBM read.
    x = jax.random.normal(kx, (2, in_channels, 16, 16), dtype=jnp.float32)
    x = x.astype(jnp.bfloat16)                       # NCHW, bf16

    params = init_sep_head_params(kp, in_channels, heads, head_conv)

    out = sep_head_forward(x, params)
    out = jax.tree_util.tree_map(jax.block_until_ready, out)

    # Verify against the pure-JAX reference (same bf16 input rounding, f32 accum).
    ref = sep_head_forward_ref(x, params)
    for name in heads:
        assert out[name].shape == (2, heads[name][0], 16, 16), (name, out[name].shape)
        assert jnp.allclose(out[name], ref[name], atol=1e-2, rtol=1e-2), name

    print("KERNEL_OK")
</pallas_src>

<mosaic_0001>
module attributes {stable_mosaic.version = 11 : i64} {
  func.func @_fused_sep_head_kernel(%arg0: i32, %arg1: i32, %arg2: memref<1x8x256xbf16, #tpu.memory_space<vmem>>, %arg3: memref<8x160xbf16, #tpu.memory_space<vmem>>, %arg4: memref<160x1xf32, #tpu.memory_space<vmem>>, %arg5: memref<32x2xbf16, #tpu.memory_space<vmem>>, %arg6: memref<2x1xf32, #tpu.memory_space<vmem>>, %arg7: memref<32x2xbf16, #tpu.memory_space<vmem>>, %arg8: memref<2x1xf32, #tpu.memory_space<vmem>>, %arg9: memref<32x1xbf16, #tpu.memory_space<vmem>>, %arg10: memref<1x1xf32, #tpu.memory_space<vmem>>, %arg11: memref<32x3xbf16, #tpu.memory_space<vmem>>, %arg12: memref<3x1xf32, #tpu.memory_space<vmem>>, %arg13: memref<32x2xbf16, #tpu.memory_space<vmem>>, %arg14: memref<2x1xf32, #tpu.memory_space<vmem>>, %arg15: memref<1x2x256xf32, #tpu.memory_space<vmem>>, %arg16: memref<1x2x256xf32, #tpu.memory_space<vmem>>, %arg17: memref<1x1x256xf32, #tpu.memory_space<vmem>>, %arg18: memref<1x3x256xf32, #tpu.memory_space<vmem>>, %arg19: memref<1x2x256xf32, #tpu.memory_space<vmem>>) attributes {dimension_semantics = [#tpu.dimension_semantics<parallel>, #tpu.dimension_semantics<parallel>], iteration_bounds = array<i64: 2, 1>, scalar_prefetch = 0 : i64, scratch_operands = 0 : i64, tpu.core_type = #tpu.core_type<tc>, window_params = [{transform_indices = @transform_0, window_bounds = array<i64: 1, 8, 256>}, {pipeline_mode = #tpu.pipeline_mode<synchronous>, transform_indices = @transform_1, window_bounds = array<i64: 8, 160>}, {pipeline_mode = #tpu.pipeline_mode<synchronous>, transform_indices = @transform_2, window_bounds = array<i64: 160, 1>}, {pipeline_mode = #tpu.pipeline_mode<synchronous>, transform_indices = @transform_3, window_bounds = array<i64: 32, 2>}, {pipeline_mode = #tpu.pipeline_mode<synchronous>, transform_indices = @transform_4, window_bounds = array<i64: 2, 1>}, {pipeline_mode = #tpu.pipeline_mode<synchronous>, transform_indices = @transform_5, window_bounds = array<i64: 32, 2>}, {pipeline_mode = #tpu.pipeline_mode<synchronous>, transform_indices = @transform_6, window_bounds = array<i64: 2, 1>}, {pipeline_mode = #tpu.pipeline_mode<synchronous>, transform_indices = @transform_7, window_bounds = array<i64: 32, 1>}, {pipeline_mode = #tpu.pipeline_mode<synchronous>, transform_indices = @transform_8, window_bounds = array<i64: 1, 1>}, {pipeline_mode = #tpu.pipeline_mode<synchronous>, transform_indices = @transform_9, window_bounds = array<i64: 32, 3>}, {pipeline_mode = #tpu.pipeline_mode<synchronous>, transform_indices = @transform_10, window_bounds = array<i64: 3, 1>}, {pipeline_mode = #tpu.pipeline_mode<synchronous>, transform_indices = @transform_11, window_bounds = array<i64: 32, 2>}, {pipeline_mode = #tpu.pipeline_mode<synchronous>, transform_indices = @transform_12, window_bounds = array<i64: 2, 1>}, {transform_indices = @transform_13, window_bounds = array<i64: 1, 2, 256>}, {transform_indices = @transform_14, window_bounds = array<i64: 1, 2, 256>}, {transform_indices = @transform_15, window_bounds = array<i64: 1, 1, 256>}, {transform_indices = @transform_16, window_bounds = array<i64: 1, 3, 256>}, {transform_indices = @transform_17, window_bounds = array<i64: 1, 2, 256>}]} {
    %c0 = arith.constant 0 : index
    %c0_0 = arith.constant 0 : index
    %c0_1 = arith.constant 0 : index
    %0 = vector.load %arg2[%c0, %c0_0, %c0_1] : memref<1x8x256xbf16, #tpu.memory_space<vmem>>, vector<1x8x256xbf16>
    %1 = vector.shape_cast %0 : vector<1x8x256xbf16> to vector<8x256xbf16>
    %c0_2 = arith.constant 0 : index
    %c0_3 = arith.constant 0 : index
    %2 = vector.load %arg3[%c0_2, %c0_3] : memref<8x160xbf16, #tpu.memory_space<vmem>>, vector<8x160xbf16>
    %c0_4 = arith.constant 0 : index
    %c0_5 = arith.constant 0 : index
    %3 = vector.load %arg4[%c0_4, %c0_5] : memref<160x1xf32, #tpu.memory_space<vmem>>, vector<160x1xf32>
    %cst = arith.constant dense<0.000000e+00> : vector<160x256xf32>
    %4 = tpu.matmul %2, %1, %cst {dimension_numbers = #tpu.dot_dimension_numbers<[0], [0], [1], [1], [0, 1, 1, 1], [], []>} : vector<8x160xbf16>, vector<8x256xbf16>, vector<160x256xf32> -> vector<160x256xf32>
    %5 = vector.broadcast %3 : vector<160x1xf32> to vector<160x256xf32>
    %6 = arith.addf %4, %5 : vector<160x256xf32>
    %cst_6 = arith.constant 0.000000e+00 : f32
    %7 = vector.broadcast %cst_6 : f32 to vector<160x256xf32>
    %8 = arith.maximumf %6, %7 : vector<160x256xf32>
    %9 = arith.truncf %8 : vector<160x256xf32> to vector<160x256xbf16>
    %c0_7 = arith.constant 0 : index
    %c0_8 = arith.constant 0 : index
    %10 = vector.load %arg5[%c0_7, %c0_8] : memref<32x2xbf16, #tpu.memory_space<vmem>>, vector<32x2xbf16>
    %c0_9 = arith.constant 0 : index
    %c0_10 = arith.constant 0 : index
    %11 = vector.load %arg6[%c0_9, %c0_10] : memref<2x1xf32, #tpu.memory_space<vmem>>, vector<2x1xf32>
    %12 = vector.extract_strided_slice %9 {offsets = [0, 0], sizes = [32, 256], strides = [1, 1]} : vector<160x256xbf16> to vector<32x256xbf16>
    %cst_11 = arith.constant dense<0.000000e+00> : vector<2x256xf32>
    %13 = tpu.matmul %10, %12, %cst_11 {dimension_numbers = #tpu.dot_dimension_numbers<[0], [0], [1], [1], [0, 1, 1, 1], [], []>} : vector<32x2xbf16>, vector<32x256xbf16>, vector<2x256xf32> -> vector<2x256xf32>
    %14 = vector.broadcast %11 : vector<2x1xf32> to vector<2x256xf32>
    %15 = arith.addf %13, %14 : vector<2x256xf32>
    %c0_12 = arith.constant 0 : index
    %c0_13 = arith.constant 0 : index
    %c0_14 = arith.constant 0 : index
    %16 = vector.load %arg15[%c0_12, %c0_13, %c0_14] : memref<1x2x256xf32, #tpu.memory_space<vmem>>, vector<1x2x256xf32>
    %17 = vector.shape_cast %16 : vector<1x2x256xf32> to vector<2x256xf32>
    %18 = vector.shape_cast %15 : vector<2x256xf32> to vector<1x2x256xf32>
    tpu.vector_store %arg15[%c0_12, %c0_13, %c0_14], %18 {strides = array<i32>} : memref<1x2x256xf32, #tpu.memory_space<vmem>>, vector<1x2x256xf32>,
    %c0_15 = arith.constant 0 : index
    %c0_16 = arith.constant 0 : index
    %19 = vector.load %arg7[%c0_15, %c0_16] : memref<32x2xbf16, #tpu.memory_space<vmem>>, vector<32x2xbf16>
    %c0_17 = arith.constant 0 : index
    %c0_18 = arith.constant 0 : index
    %20 = vector.load %arg8[%c0_17, %c0_18] : memref<2x1xf32, #tpu.memory_space<vmem>>, vector<2x1xf32>
    %21 = vector.extract_strided_slice %9 {offsets = [32, 0], sizes = [32, 256], strides = [1, 1]} : vector<160x256xbf16> to vector<32x256xbf16>
    %cst_19 = arith.constant dense<0.000000e+00> : vector<2x256xf32>
    %22 = tpu.matmul %19, %21, %cst_19 {dimension_numbers = #tpu.dot_dimension_numbers<[0], [0], [1], [1], [0, 1, 1, 1], [], []>} : vector<32x2xbf16>, vector<32x256xbf16>, vector<2x256xf32> -> vector<2x256xf32>
    %23 = vector.broadcast %20 : vector<2x1xf32> to vector<2x256xf32>
    %24 = arith.addf %22, %23 : vector<2x256xf32>
    %c0_20 = arith.constant 0 : index
    %c0_21 = arith.constant 0 : index
    %c0_22 = arith.constant 0 : index
    %25 = vector.load %arg16[%c0_20, %c0_21, %c0_22] : memref<1x2x256xf32, #tpu.memory_space<vmem>>, vector<1x2x256xf32>
    %26 = vector.shape_cast %25 : vector<1x2x256xf32> to vector<2x256xf32>
    %27 = vector.shape_cast %24 : vector<2x256xf32> to vector<1x2x256xf32>
    tpu.vector_store %arg16[%c0_20, %c0_21, %c0_22], %27 {strides = array<i32>} : memref<1x2x256xf32, #tpu.memory_space<vmem>>, vector<1x2x256xf32>,
    %c0_23 = arith.constant 0 : index
    %c0_24 = arith.constant 0 : index
    %28 = vector.load %arg9[%c0_23, %c0_24] : memref<32x1xbf16, #tpu.memory_space<vmem>>, vector<32x1xbf16>
    %c0_25 = arith.constant 0 : index
    %c0_26 = arith.constant 0 : index
    %29 = vector.load %arg10[%c0_25, %c0_26] : memref<1x1xf32, #tpu.memory_space<vmem>>, vector<1x1xf32>
    %30 = vector.extract_strided_slice %9 {offsets = [64, 0], sizes = [32, 256], strides = [1, 1]} : vector<160x256xbf16> to vector<32x256xbf16>
    %cst_27 = arith.constant dense<0.000000e+00> : vector<1x256xf32>
    %31 = tpu.matmul %28, %30, %cst_27 {dimension_numbers = #tpu.dot_dimension_numbers<[0], [0], [1], [1], [0, 1, 1, 1], [], []>} : vector<32x1xbf16>, vector<32x256xbf16>, vector<1x256xf32> -> vector<1x256xf32>
    %32 = vector.broadcast %29 : vector<1x1xf32> to vector<1x256xf32>
    %33 = arith.addf %31, %32 : vector<1x256xf32>
    %c0_28 = arith.constant 0 : index
    %c0_29 = arith.constant 0 : index
    %c0_30 = arith.constant 0 : index
    %34 = vector.load %arg17[%c0_28, %c0_29, %c0_30] : memref<1x1x256xf32, #tpu.memory_space<vmem>>, vector<1x1x256xf32>
    %35 = vector.shape_cast %34 : vector<1x1x256xf32> to vector<1x256xf32>
    %36 = vector.shape_cast %33 : vector<1x256xf32> to vector<1x1x256xf32>
    tpu.vector_store %arg17[%c0_28, %c0_29, %c0_30], %36 {strides = array<i32>} : memref<1x1x256xf32, #tpu.memory_space<vmem>>, vector<1x1x256xf32>,
    %c0_31 = arith.constant 0 : index
    %c0_32 = arith.constant 0 : index
    %37 = vector.load %arg11[%c0_31, %c0_32] : memref<32x3xbf16, #tpu.memory_space<vmem>>, vector<32x3xbf16>
    %c0_33 = arith.constant 0 : index
    %c0_34 = arith.constant 0 : index
    %38 = vector.load %arg12[%c0_33, %c0_34] : memref<3x1xf32, #tpu.memory_space<vmem>>, vector<3x1xf32>
    %39 = vector.extract_strided_slice %9 {offsets = [96, 0], sizes = [32, 256], strides = [1, 1]} : vector<160x256xbf16> to vector<32x256xbf16>
    %cst_35 = arith.constant dense<0.000000e+00> : vector<3x256xf32>
    %40 = tpu.matmul %37, %39, %cst_35 {dimension_numbers = #tpu.dot_dimension_numbers<[0], [0], [1], [1], [0, 1, 1, 1], [], []>} : vector<32x3xbf16>, vector<32x256xbf16>, vector<3x256xf32> -> vector<3x256xf32>
    %41 = vector.broadcast %38 : vector<3x1xf32> to vector<3x256xf32>
    %42 = arith.addf %40, %41 : vector<3x256xf32>
    %c0_36 = arith.constant 0 : index
    %c0_37 = arith.constant 0 : index
    %c0_38 = arith.constant 0 : index
    %43 = vector.load %arg18[%c0_36, %c0_37, %c0_38] : memref<1x3x256xf32, #tpu.memory_space<vmem>>, vector<1x3x256xf32>
    %44 = vector.shape_cast %43 : vector<1x3x256xf32> to vector<3x256xf32>
    %45 = vector.shape_cast %42 : vector<3x256xf32> to vector<1x3x256xf32>
    tpu.vector_store %arg18[%c0_36, %c0_37, %c0_38], %45 {strides = array<i32>} : memref<1x3x256xf32, #tpu.memory_space<vmem>>, vector<1x3x256xf32>,
    %c0_39 = arith.constant 0 : index
    %c0_40 = arith.constant 0 : index
    %46 = vector.load %arg13[%c0_39, %c0_40] : memref<32x2xbf16, #tpu.memory_space<vmem>>, vector<32x2xbf16>
    %c0_41 = arith.constant 0 : index
    %c0_42 = arith.constant 0 : index
    %47 = vector.load %arg14[%c0_41, %c0_42] : memref<2x1xf32, #tpu.memory_space<vmem>>, vector<2x1xf32>
    %48 = vector.extract_strided_slice %9 {offsets = [128, 0], sizes = [32, 256], strides = [1, 1]} : vector<160x256xbf16> to vector<32x256xbf16>
    %cst_43 = arith.constant dense<0.000000e+00> : vector<2x256xf32>
    %49 = tpu.matmul %46, %48, %cst_43 {dimension_numbers = #tpu.dot_dimension_numbers<[0], [0], [1], [1], [0, 1, 1, 1], [], []>} : vector<32x2xbf16>, vector<32x256xbf16>, vector<2x256xf32> -> vector<2x256xf32>
    %50 = vector.broadcast %47 : vector<2x1xf32> to vector<2x256xf32>
    %51 = arith.addf %49, %50 : vector<2x256xf32>
    %c0_44 = arith.constant 0 : index
    %c0_45 = arith.constant 0 : index
    %c0_46 = arith.constant 0 : index
    %52 = vector.load %arg19[%c0_44, %c0_45, %c0_46] : memref<1x2x256xf32, #tpu.memory_space<vmem>>, vector<1x2x256xf32>
    %53 = vector.shape_cast %52 : vector<1x2x256xf32> to vector<2x256xf32>
    %54 = vector.shape_cast %51 : vector<2x256xf32> to vector<1x2x256xf32>
    tpu.vector_store %arg19[%c0_44, %c0_45, %c0_46], %54 {strides = array<i32>} : memref<1x2x256xf32, #tpu.memory_space<vmem>>, vector<1x2x256xf32>,
    return
  }
  func.func @transform_0(%arg0: i32, %arg1: i32) -> (i32, i32, i32) {
    %c0_i32 = arith.constant 0 : i32
    %c0_i32_0 = arith.constant 0 : i32
    return %arg0, %c0_i32, %arg1 : i32, i32, i32
  }
  func.func @transform_1(%arg0: i32, %arg1: i32) -> (i32, i32) {
    %c0_i32 = arith.constant 0 : i32
    %c0_i32_0 = arith.constant 0 : i32
    %c0_i32_1 = arith.constant 0 : i32
    return %c0_i32, %c0_i32_0 : i32, i32
  }
  func.func @transform_2(%arg0: i32, %arg1: i32) -> (i32, i32) {
    %c0_i32 = arith.constant 0 : i32
    %c0_i32_0 = arith.constant 0 : i32
    %c0_i32_1 = arith.constant 0 : i32
    return %c0_i32, %c0_i32_0 : i32, i32
  }
  func.func @transform_3(%arg0: i32, %arg1: i32) -> (i32, i32) {
    %c0_i32 = arith.constant 0 : i32
    %c0_i32_0 = arith.constant 0 : i32
    %c0_i32_1 = arith.constant 0 : i32
    return %c0_i32, %c0_i32_0 : i32, i32
  }
  func.func @transform_4(%arg0: i32, %arg1: i32) -> (i32, i32) {
    %c0_i32 = arith.constant 0 : i32
    %c0_i32_0 = arith.constant 0 : i32
    %c0_i32_1 = arith.constant 0 : i32
    return %c0_i32, %c0_i32_0 : i32, i32
  }
  func.func @transform_5(%arg0: i32, %arg1: i32) -> (i32, i32) {
    %c0_i32 = arith.constant 0 : i32
    %c0_i32_0 = arith.constant 0 : i32
    %c0_i32_1 = arith.constant 0 : i32
    return %c0_i32, %c0_i32_0 : i32, i32
  }
  func.func @transform_6(%arg0: i32, %arg1: i32) -> (i32, i32) {
    %c0_i32 = arith.constant 0 : i32
    %c0_i32_0 = arith.constant 0 : i32
    %c0_i32_1 = arith.constant 0 : i32
    return %c0_i32, %c0_i32_0 : i32, i32
  }
  func.func @transform_7(%arg0: i32, %arg1: i32) -> (i32, i32) {
    %c0_i32 = arith.constant 0 : i32
    %c0_i32_0 = arith.constant 0 : i32
    %c0_i32_1 = arith.constant 0 : i32
    return %c0_i32, %c0_i32_0 : i32, i32
  }
  func.func @transform_8(%arg0: i32, %arg1: i32) -> (i32, i32) {
    %c0_i32 = arith.constant 0 : i32
    %c0_i32_0 = arith.constant 0 : i32
    %c0_i32_1 = arith.constant 0 : i32
    return %c0_i32, %c0_i32_0 : i32, i32
  }
  func.func @transform_9(%arg0: i32, %arg1: i32) -> (i32, i32) {
    %c0_i32 = arith.constant 0 : i32
    %c0_i32_0 = arith.constant 0 : i32
    %c0_i32_1 = arith.constant 0 : i32
    return %c0_i32, %c0_i32_0 : i32, i32
  }
  func.func @transform_10(%arg0: i32, %arg1: i32) -> (i32, i32) {
    %c0_i32 = arith.constant 0 : i32
    %c0_i32_0 = arith.constant 0 : i32
    %c0_i32_1 = arith.constant 0 : i32
    return %c0_i32, %c0_i32_0 : i32, i32
  }
  func.func @transform_11(%arg0: i32, %arg1: i32) -> (i32, i32) {
    %c0_i32 = arith.constant 0 : i32
    %c0_i32_0 = arith.constant 0 : i32
    %c0_i32_1 = arith.constant 0 : i32
    return %c0_i32, %c0_i32_0 : i32, i32
  }
  func.func @transform_12(%arg0: i32, %arg1: i32) -> (i32, i32) {
    %c0_i32 = arith.constant 0 : i32
    %c0_i32_0 = arith.constant 0 : i32
    %c0_i32_1 = arith.constant 0 : i32
    return %c0_i32, %c0_i32_0 : i32, i32
  }
  func.func @transform_13(%arg0: i32, %arg1: i32) -> (i32, i32, i32) {
    %c0_i32 = arith.constant 0 : i32
    %c0_i32_0 = arith.constant 0 : i32
    return %arg0, %c0_i32, %arg1 : i32, i32, i32
  }
  func.func @transform_14(%arg0: i32, %arg1: i32) -> (i32, i32, i32) {
    %c0_i32 = arith.constant 0 : i32
    %c0_i32_0 = arith.constant 0 : i32
    return %arg0, %c0_i32, %arg1 : i32, i32, i32
  }
  func.func @transform_15(%arg0: i32, %arg1: i32) -> (i32, i32, i32) {
    %c0_i32 = arith.constant 0 : i32
    %c0_i32_0 = arith.constant 0 : i32
    return %arg0, %c0_i32, %arg1 : i32, i32, i32
  }
  func.func @transform_16(%arg0: i32, %arg1: i32) -> (i32, i32, i32) {
    %c0_i32 = arith.constant 0 : i32
    %c0_i32_0 = arith.constant 0 : i32
    return %arg0, %c0_i32, %arg1 : i32, i32, i32
  }
  func.func @transform_17(%arg0: i32, %arg1: i32) -> (i32, i32, i32) {
    %c0_i32 = arith.constant 0 : i32
    %c0_i32_0 = arith.constant 0 : i32
    return %arg0, %c0_i32, %arg1 : i32, i32, i32
  }
}

</mosaic_0001>

<llo_original>
// kernel: tpu_custom_call.1
$region0: #{tpu_custom_call.1}
  #allocation0 [shape = 'u32[]', space=smem, size = 0x4, offset = 0x4, fixed_abs, tag = 'smem constant byte address 0x4 - core index']
  #allocation1 [shape = 'u32[144,128]{1,0:T(1,128)}', space=vmem, size = 0x12000, scoped, tag = 'internal scratch']
  #allocation2 [shape = 'f32[1,1]{1,0:T(1,128)S(1)}', space=vmem, size = 0x200, scoped, tag = 'scoped memory for tpu_custom_call.1']
  %s0 = inlined_call_operand.vmem [shape: bf16[2,8,256], index: 0, kind: input, shape index: {}]
  %s1 = inlined_call_operand.vmem [shape: bf16[8,160], index: 1, kind: input, shape index: {}]
  %s2 = inlined_call_operand.vmem [shape: f32[160,1], index: 2, kind: input, shape index: {}]
  %s3 = inlined_call_operand.vmem [shape: bf16[32,2], index: 3, kind: input, shape index: {}]
  %s4 = inlined_call_operand.vmem [shape: f32[2,1], index: 4, kind: input, shape index: {}]
  %s5 = inlined_call_operand.vmem [shape: bf16[32,2], index: 5, kind: input, shape index: {}]
  %s6 = inlined_call_operand.vmem [shape: f32[2,1], index: 6, kind: input, shape index: {}]
  %s7 = inlined_call_operand.vmem [shape: bf16[32,1], index: 7, kind: input, shape index: {}]
  %s8 = inlined_call_operand.<no memory space> [shape: f32[1,1], index: 8, kind: input, shape index: {}]
  %s9 = inlined_call_operand.vmem [shape: bf16[32,3], index: 9, kind: input, shape index: {}]
  %s10 = inlined_call_operand.vmem [shape: f32[3,1], index: 10, kind: input, shape index: {}]
  %s11 = inlined_call_operand.vmem [shape: bf16[32,2], index: 11, kind: input, shape index: {}]
  %s12 = inlined_call_operand.vmem [shape: f32[2,1], index: 12, kind: input, shape index: {}]
  %s13 = inlined_call_operand.hbm [shape: f32[2,2,256], index: 13, kind: output, shape index: {0}]
  %s14 = inlined_call_operand.hbm [shape: f32[2,2,256], index: 14, kind: output, shape index: {1}]
  %s15 = inlined_call_operand.hbm [shape: f32[2,1,256], index: 15, kind: output, shape index: {2}]
  %s16 = inlined_call_operand.vmem [shape: f32[2,3,256], index: 16, kind: output, shape index: {3}]
  %s17 = inlined_call_operand.hbm [shape: f32[2,2,256], index: 17, kind: output, shape index: {4}]
  %18 = xla_tuple %s13, %s14, %s15, %s16, %s17
  %s19 = sld [smem:[#allocation0]]
  $region117: #{tpu_custom_call.1} parent=0
    _
  %s21 = ssub.s32 1, %s19
  %s22 = scalar_select 0, %s21, %s19
  %v23 = vstv %s8
  %24 = vst [vmem:[#allocation2] sm:$0x1] %v23
  $region1: #{tpu_custom_call.1} parent=0
    #allocation3 [shape = 'u8[4096]{0}', space=vmem, size = 0x1000, scoped, tag = 'output window, operand 0']
    #allocation4 [shape = 's32[2]{0}', space=sflag, size = 0x8, scoped, tag = 'scoped memory for tpu_custom_call.1']
    #allocation5 [shape = 'u8[4096]{0}', space=vmem, size = 0x1000, scoped, tag = 'output window, operand 1']
    #allocation6 [shape = 's32[2]{0}', space=sflag, size = 0x8, scoped, tag = 'scoped memory for tpu_custom_call.1']
    #allocation7 [shape = 'u8[2048]{0}', space=vmem, size = 0x800, scoped, tag = 'output window, operand 2']
    #allocation8 [shape = 'u8[4096]{0}', space=vmem, size = 0x1000, scoped, tag = 'output window, operand 4']
    #allocation9 [shape = 's32[2]{0}', space=sflag, size = 0x8, scoped, tag = 'scoped memory for tpu_custom_call.1']
    %25 = vsyncpa [#allocation4], 0
    %s26 = scalar_lea.sflag [#allocation4], 1
    %27 = vsyncpa %s26, 0
    %28 = vsyncpa [#allocation6], 0
    %s29 = scalar_lea.sflag [#allocation6], 1
    %30 = vsyncpa %s29, 0
    %31 = vsyncpa [#allocation9], 0
    %s32 = scalar_lea.sflag [#allocation9], 1
    %33 = vsyncpa %s32, 0
    loop: start=0, step=1, limit=4
    $region2: #{tpu_custom_call.1} parent=1 // loop_pre_header
      _
    $region3: #{tpu_custom_call.1} parent=1 // loop_header
      %s35 = sphi 0, %s39
      %p36 = scmp.ge.s32.totalorder %s35, 4
      %s42 = sphi 0, %s54
      %s43 = sphi 0, %s50
      %s44 = sphi 0, %s42
      %s45 = sphi 0, %s43
      %s46 = sphi 0, %s44
      %s47 = sphi 0, %s45
      %s59 = sphi 0, %s61
      %s62 = sphi 0, %s59
      %s63 = sphi 0, %s62
      %s79 = sphi 0, %s63
      %s83 = sphi 0, %s83
      %s85 = sphi 0, %s83
      %s86 = sphi 0, %s85
      %s100 = sphi 0, %s86
      %s104 = sphi 0, %s104
      %s106 = sphi 0, %s104
      %s107 = sphi 0, %s106
      %s121 = sphi 0, %s107
      %s125 = sphi 0, %s125
      %s127 = sphi 0, %s125
      %s128 = sphi 0, %s127
      %s142 = sphi 0, %s128
      %s146 = sphi 0, %s146
      %s148 = sphi 0, %s146
      %s149 = sphi 0, %s148
      %s163 = sphi 0, %s149
      %s167 = sphi 0, %s167
      %s169 = sphi 0, %s167
      %s170 = sphi 0, %s169
      %s184 = sphi 0, %s170
      %s188 = sphi 0, %s188
      %s190 = sphi 0, %s188
      %s191 = sphi 0, %s190
      %s205 = sphi 0, %s191
      %s209 = sphi 0, %s209
      %s211 = sphi 0, %s209
      %s212 = sphi 0, %s211
      %s226 = sphi 0, %s212
      %s230 = sphi 0, %s230
      %s232 = sphi 0, %s230
      %s233 = sphi 0, %s232
      %s247 = sphi 0, %s233
      %s251 = sphi 0, %s251
      %s253 = sphi 0, %s251
      %s254 = sphi 0, %s253
      %s268 = sphi 0, %s254
      %s272 = sphi 0, %s272
      %s274 = sphi 0, %s272
      %s275 = sphi 0, %s274
      %s289 = sphi 0, %s275
      %s293 = sphi 0, %s293
      %s295 = sphi 0, %s293
      %s296 = sphi 0, %s295
      %s310 = sphi 0, %s296
      %s314 = sphi 0, %s314
      %s316 = sphi 0, %s314
      %s317 = sphi 0, %s316
      %s331 = sphi 0, %s317
      %s339 = sphi 0, %s341
      %s342 = sphi 0, %s339
      %s343 = sphi 0, %s342
      %s359 = sphi 0, %s343
      %s367 = sphi 0, %s369
      %s370 = sphi 0, %s367
      %s371 = sphi 0, %s370
      %s387 = sphi 0, %s371
      %s395 = sphi 0, %s397
      %s398 = sphi 0, %s395
      %s399 = sphi 0, %s398
      %s415 = sphi 0, %s399
      %s423 = sphi 0, %s425
      %s426 = sphi 0, %s423
      %s427 = sphi 0, %s426
      %s443 = sphi 0, %s427
      %s451 = sphi 0, %s453
      %s454 = sphi 0, %s451
      %s455 = sphi 0, %s454
      %s471 = sphi 0, %s455
    $region4: #{tpu_custom_call.1} parent=1 // loop_header_branch
      %38 = sbr.rel (%p36) target = $region8
    $region5: #{tpu_custom_call.1} parent=1 // loop_body
      %s40 = ssub.s32 %s35, 1
      %s41 = ssub.s32 %s35, 2
      %s48 = sadd.s32 1, %s43
      %p49 = scmp.ge.s32.totalorder %s48, 1
      %s50 = scalar_select %p49, 0, %s48
      %s51 = sadd.s32 1, %s42
      %s52 = scalar_select %p49, %s51, %s42
      %p53 = scmp.ge.s32.totalorder %s52, 2
      %s54 = scalar_select %p53, 0, %s52
      %s55 = ssub.s32 %s42, %s54
      %s56 = ssub.s32 %s43, %s50
      %s57 = sor.u32 %s55, %s56
      %p58 = scmp.eq.s32.totalorder %s57, 0
      %s60 = sadd.s32 %s59, 1
      %s61 = scalar_select %p58, %s59, %s60
      %p64 = pneg %p58
      %p65 = scmp.eq.s32.totalorder %s35, 1
      %p66 = por %p64, %p65
      %p67 = scmp.ne.s32.totalorder %s59, %s62
      %p68 = scmp.eq.s32.totalorder %s35, 0
      %p69 = por %p67, %p68
      %p70 = scmp.ne.s32.totalorder %s59, %s62
      %p71 = scmp.eq.s32.totalorder %s40, 1
      %p72 = por %p70, %p71
      %p73 = scmp.ne.s32.totalorder %s62, %s63
      %p74 = scmp.eq.s32.totalorder %s40, 0
      %p75 = por %p73, %p74
      %p76 = scmp.ne.s32.totalorder %s62, %s63
      %p77 = scmp.eq.s32.totalorder %s41, 1
      %p78 = por %p76, %p77
      %p80 = scmp.ne.s32.totalorder %s63, %s79
      %p81 = scmp.eq.s32.totalorder %s41, 0
      %p82 = por %p80, %p81
      %s84 = sadd.s32 %s83, 1
      %p87 = scmp.eq.s32.totalorder %s35, 1
      %p88 = scmp.ne.s32.totalorder %s83, %s85
      %p89 = scmp.eq.s32.totalorder %s35, 0
      %p90 = por %p88, %p89
      %p91 = scmp.ne.s32.totalorder %s83, %s85
      %p92 = scmp.eq.s32.totalorder %s40, 1
      %p93 = por %p91, %p92
      %p94 = scmp.ne.s32.totalorder %s85, %s86
      %p95 = scmp.eq.s32.totalorder %s40, 0
      %p96 = por %p94, %p95
      %p97 = scmp.ne.s32.totalorder %s85, %s86
      %p98 = scmp.eq.s32.totalorder %s41, 1
      %p99 = por %p97, %p98
      %p101 = scmp.ne.s32.totalorder %s86, %s100
      %p102 = scmp.eq.s32.totalorder %s41, 0
      %p103 = por %p101, %p102
      %s105 = sadd.s32 %s104, 1
      %p108 = scmp.eq.s32.totalorder %s35, 1
      %p109 = scmp.ne.s32.totalorder %s104, %s106
      %p110 = scmp.eq.s32.totalorder %s35, 0
      %p111 = por %p109, %p110
      %p112 = scmp.ne.s32.totalorder %s104, %s106
      %p113 = scmp.eq.s32.totalorder %s40, 1
      %p114 = por %p112, %p113
      %p115 = scmp.ne.s32.totalorder %s106, %s107
      %p116 = scmp.eq.s32.totalorder %s40, 0
      %p117 = por %p115, %p116
      %p118 = scmp.ne.s32.totalorder %s106, %s107
      %p119 = scmp.eq.s32.totalorder %s41, 1
      %p120 = por %p118, %p119
      %p122 = scmp.ne.s32.totalorder %s107, %s121
      %p123 = scmp.eq.s32.totalorder %s41, 0
      %p124 = por %p122, %p123
      %s126 = sadd.s32 %s125, 1
      %p129 = scmp.eq.s32.totalorder %s35, 1
      %p130 = scmp.ne.s32.totalorder %s125, %s127
      %p131 = scmp.eq.s32.totalorder %s35, 0
      %p132 = por %p130, %p131
      %p133 = scmp.ne.s32.totalorder %s125, %s127
      %p134 = scmp.eq.s32.totalorder %s40, 1
      %p135 = por %p133, %p134
      %p136 = scmp.ne.s32.totalorder %s127, %s128
      %p137 = scmp.eq.s32.totalorder %s40, 0
      %p138 = por %p136, %p137
      %p139 = scmp.ne.s32.totalorder %s127, %s128
      %p140 = scmp.eq.s32.totalorder %s41, 1
      %p141 = por %p139, %p140
      %p143 = scmp.ne.s32.totalorder %s128, %s142
      %p144 = scmp.eq.s32.totalorder %s41, 0
      %p145 = por %p143, %p144
      %s147 = sadd.s32 %s146, 1
      %p150 = scmp.eq.s32.totalorder %s35, 1
      %p151 = scmp.ne.s32.totalorder %s146, %s148
      %p152 = scmp.eq.s32.totalorder %s35, 0
      %p153 = por %p151, %p152
      %p154 = scmp.ne.s32.totalorder %s146, %s148
      %p155 = scmp.eq.s32.totalorder %s40, 1
      %p156 = por %p154, %p155
      %p157 = scmp.ne.s32.totalorder %s148, %s149
      %p158 = scmp.eq.s32.totalorder %s40, 0
      %p159 = por %p157, %p158
      %p160 = scmp.ne.s32.totalorder %s148, %s149
      %p161 = scmp.eq.s32.totalorder %s41, 1
      %p162 = por %p160, %p161
      %p164 = scmp.ne.s32.totalorder %s149, %s163
      %p165 = scmp.eq.s32.totalorder %s41, 0
      %p166 = por %p164, %p165
      %s168 = sadd.s32 %s167, 1
      %p171 = scmp.eq.s32.totalorder %s35, 1
      %p172 = scmp.ne.s32.totalorder %s167, %s169
      %p173 = scmp.eq.s32.totalorder %s35, 0
      %p174 = por %p172, %p173
      %p175 = scmp.ne.s32.totalorder %s167, %s169
      %p176 = scmp.eq.s32.totalorder %s40, 1
      %p177 = por %p175, %p176
      %p178 = scmp.ne.s32.totalorder %s169, %s170
      %p179 = scmp.eq.s32.totalorder %s40, 0
      %p180 = por %p178, %p179
      %p181 = scmp.ne.s32.totalorder %s169, %s170
      %p182 = scmp.eq.s32.totalorder %s41, 1
      %p183 = por %p181, %p182
      %p185 = scmp.ne.s32.totalorder %s170, %s184
      %p186 = scmp.eq.s32.totalorder %s41, 0
      %p187 = por %p185, %p186
      %s189 = sadd.s32 %s188, 1
      %p192 = scmp.eq.s32.totalorder %s35, 1
      %p193 = scmp.ne.s32.totalorder %s188, %s190
      %p194 = scmp.eq.s32.totalorder %s35, 0
      %p195 = por %p193, %p194
      %p196 = scmp.ne.s32.totalorder %s188, %s190
      %p197 = scmp.eq.s32.totalorder %s40, 1
      %p198 = por %p196, %p197
      %p199 = scmp.ne.s32.totalorder %s190, %s191
      %p200 = scmp.eq.s32.totalorder %s40, 0
      %p201 = por %p199, %p200
      %p202 = scmp.ne.s32.totalorder %s190, %s191
      %p203 = scmp.eq.s32.totalorder %s41, 1
      %p204 = por %p202, %p203
      %p206 = scmp.ne.s32.totalorder %s191, %s205
      %p207 = scmp.eq.s32.totalorder %s41, 0
      %p208 = por %p206, %p207
      %s210 = sadd.s32 %s209, 1
      %p213 = scmp.eq.s32.totalorder %s35, 1
      %p214 = scmp.ne.s32.totalorder %s209, %s211
      %p215 = scmp.eq.s32.totalorder %s35, 0
      %p216 = por %p214, %p215
      %p217 = scmp.ne.s32.totalorder %s209, %s211
      %p218 = scmp.eq.s32.totalorder %s40, 1
      %p219 = por %p217, %p218
      %p220 = scmp.ne.s32.totalorder %s211, %s212
      %p221 = scmp.eq.s32.totalorder %s40, 0
      %p222 = por %p220, %p221
      %p223 = scmp.ne.s32.totalorder %s211, %s212
      %p224 = scmp.eq.s32.totalorder %s41, 1
      %p225 = por %p223, %p224
      %p227 = scmp.ne.s32.totalorder %s212, %s226
      %p228 = scmp.eq.s32.totalorder %s41, 0
      %p229 = por %p227, %p228
      %s231 = sadd.s32 %s230, 1
      %p234 = scmp.eq.s32.totalorder %s35, 1
      %p235 = scmp.ne.s32.totalorder %s230, %s232
      %p236 = scmp.eq.s32.totalorder %s35, 0
      %p237 = por %p235, %p236
      %p238 = scmp.ne.s32.totalorder %s230, %s232
      %p239 = scmp.eq.s32.totalorder %s40, 1
      %p240 = por %p238, %p239
      %p241 = scmp.ne.s32.totalorder %s232, %s233
      %p242 = scmp.eq.s32.totalorder %s40, 0
      %p243 = por %p241, %p242
      %p244 = scmp.ne.s32.totalorder %s232, %s233
      %p245 = scmp.eq.s32.totalorder %s41, 1
      %p246 = por %p244, %p245
      %p248 = scmp.ne.s32.totalorder %s233, %s247
      %p249 = scmp.eq.s32.totalorder %s41, 0
      %p250 = por %p248, %p249
      %s252 = sadd.s32 %s251, 1
      %p255 = scmp.eq.s32.totalorder %s35, 1
      %p256 = scmp.ne.s32.totalorder %s251, %s253
      %p257 = scmp.eq.s32.totalorder %s35, 0
      %p258 = por %p256, %p257
      %p259 = scmp.ne.s32.totalorder %s251, %s253
      %p260 = scmp.eq.s32.totalorder %s40, 1
      %p261 = por %p259, %p260
      %p262 = scmp.ne.s32.totalorder %s253, %s254
      %p263 = scmp.eq.s32.totalorder %s40, 0
      %p264 = por %p262, %p263
      %p265 = scmp.ne.s32.totalorder %s253, %s254
      %p266 = scmp.eq.s32.totalorder %s41, 1
      %p267 = por %p265, %p266
      %p269 = scmp.ne.s32.totalorder %s254, %s268
      %p270 = scmp.eq.s32.totalorder %s41, 0
      %p271 = por %p269, %p270
      %s273 = sadd.s32 %s272, 1
      %p276 = scmp.eq.s32.totalorder %s35, 1
      %p277 = scmp.ne.s32.totalorder %s272, %s274
      %p278 = scmp.eq.s32.totalorder %s35, 0
      %p279 = por %p277, %p278
      %p280 = scmp.ne.s32.totalorder %s272, %s274
      %p281 = scmp.eq.s32.totalorder %s40, 1
      %p282 = por %p280, %p281
      %p283 = scmp.ne.s32.totalorder %s274, %s275
      %p284 = scmp.eq.s32.totalorder %s40, 0
      %p285 = por %p283, %p284
      %p286 = scmp.ne.s32.totalorder %s274, %s275
      %p287 = scmp.eq.s32.totalorder %s41, 1
      %p288 = por %p286, %p287
      %p290 = scmp.ne.s32.totalorder %s275, %s289
      %p291 = scmp.eq.s32.totalorder %s41, 0
      %p292 = por %p290, %p291
      %s294 = sadd.s32 %s293, 1
      %p297 = scmp.eq.s32.totalorder %s35, 1
      %p298 = scmp.ne.s32.totalorder %s293, %s295
      %p299 = scmp.eq.s32.totalorder %s35, 0
      %p300 = por %p298, %p299
      %p301 = scmp.ne.s32.totalorder %s293, %s295
      %p302 = scmp.eq.s32.totalorder %s40, 1
      %p303 = por %p301, %p302
      %p304 = scmp.ne.s32.totalorder %s295, %s296
      %p305 = scmp.eq.s32.totalorder %s40, 0
      %p306 = por %p304, %p305
      %p307 = scmp.ne.s32.totalorder %s295, %s296
      %p308 = scmp.eq.s32.totalorder %s41, 1
      %p309 = por %p307, %p308
      %p311 = scmp.ne.s32.totalorder %s296, %s310
      %p312 = scmp.eq.s32.totalorder %s41, 0
      %p313 = por %p311, %p312
      %s315 = sadd.s32 %s314, 1
      %p318 = scmp.eq.s32.totalorder %s35, 1
      %p319 = scmp.ne.s32.totalorder %s314, %s316
      %p320 = scmp.eq.s32.totalorder %s35, 0
      %p321 = por %p319, %p320
      %p322 = scmp.ne.s32.totalorder %s314, %s316
      %p323 = scmp.eq.s32.totalorder %s40, 1
      %p324 = por %p322, %p323
      %p325 = scmp.ne.s32.totalorder %s316, %s317
      %p326 = scmp.eq.s32.totalorder %s40, 0
      %p327 = por %p325, %p326
      %p328 = scmp.ne.s32.totalorder %s316, %s317
      %p329 = scmp.eq.s32.totalorder %s41, 1
      %p330 = por %p328, %p329
      %p332 = scmp.ne.s32.totalorder %s317, %s331
      %p333 = scmp.eq.s32.totalorder %s41, 0
      %p334 = por %p332, %p333
      %s335 = ssub.s32 %s42, %s54
      %s336 = ssub.s32 %s43, %s50
      %s337 = sor.u32 %s335, %s336
      %p338 = scmp.eq.s32.totalorder %s337, 0
      %s340 = sadd.s32 %s339, 1
      %s341 = scalar_select %p338, %s339, %s340
      %p344 = pneg %p338
      %p345 = scmp.eq.s32.totalorder %s35, 1
      %p346 = por %p344, %p345
      %p347 = scmp.ne.s32.totalorder %s339, %s342
      %p348 = scmp.eq.s32.totalorder %s35, 0
      %p349 = por %p347, %p348
      %p350 = scmp.ne.s32.totalorder %s339, %s342
      %p351 = scmp.eq.s32.totalorder %s40, 1
      %p352 = por %p350, %p351
      %p353 = scmp.ne.s32.totalorder %s342, %s343
      %p354 = scmp.eq.s32.totalorder %s40, 0
      %p355 = por %p353, %p354
      %p356 = scmp.ne.s32.totalorder %s342, %s343
      %p357 = scmp.eq.s32.totalorder %s41, 1
      %p358 = por %p356, %p357
      %p360 = scmp.ne.s32.totalorder %s343, %s359
      %p361 = scmp.eq.s32.totalorder %s41, 0
      %p362 = por %p360, %p361
      %s363 = ssub.s32 %s42, %s54
      %s364 = ssub.s32 %s43, %s50
      %s365 = sor.u32 %s363, %s364
      %p366 = scmp.eq.s32.totalorder %s365, 0
      %s368 = sadd.s32 %s367, 1
      %s369 = scalar_select %p366, %s367, %s368
      %p372 = pneg %p366
      %p373 = scmp.eq.s32.totalorder %s35, 1
      %p374 = por %p372, %p373
      %p375 = scmp.ne.s32.totalorder %s367, %s370
      %p376 = scmp.eq.s32.totalorder %s35, 0
      %p377 = por %p375, %p376
      %p378 = scmp.ne.s32.totalorder %s367, %s370
      %p379 = scmp.eq.s32.totalorder %s40, 1
      %p380 = por %p378, %p379
      %p381 = scmp.ne.s32.totalorder %s370, %s371
      %p382 = scmp.eq.s32.totalorder %s40, 0
      %p383 = por %p381, %p382
      %p384 = scmp.ne.s32.totalorder %s370, %s371
      %p385 = scmp.eq.s32.totalorder %s41, 1
      %p386 = por %p384, %p385
      %p388 = scmp.ne.s32.totalorder %s371, %s387
      %p389 = scmp.eq.s32.totalorder %s41, 0
      %p390 = por %p388, %p389
      %s391 = ssub.s32 %s42, %s54
      %s392 = ssub.s32 %s43, %s50
      %s393 = sor.u32 %s391, %s392
      %p394 = scmp.eq.s32.totalorder %s393, 0
      %s396 = sadd.s32 %s395, 1
      %s397 = scalar_select %p394, %s395, %s396
      %p400 = pneg %p394
      %p401 = scmp.eq.s32.totalorder %s35, 1
      %p402 = por %p400, %p401
      %p403 = scmp.ne.s32.totalorder %s395, %s398
      %p404 = scmp.eq.s32.totalorder %s35, 0
      %p405 = por %p403, %p404
      %p406 = scmp.ne.s32.totalorder %s395, %s398
      %p407 = scmp.eq.s32.totalorder %s40, 1
      %p408 = por %p406, %p407
      %p409 = scmp.ne.s32.totalorder %s398, %s399
      %p410 = scmp.eq.s32.totalorder %s40, 0
      %p411 = por %p409, %p410
      %p412 = scmp.ne.s32.totalorder %s398, %s399
      %p413 = scmp.eq.s32.totalorder %s41, 1
      %p414 = por %p412, %p413
      %p416 = scmp.ne.s32.totalorder %s399, %s415
      %p417 = scmp.eq.s32.totalorder %s41, 0
      %p418 = por %p416, %p417
      %s419 = ssub.s32 %s42, %s54
      %s420 = ssub.s32 %s43, %s50
      %s421 = sor.u32 %s419, %s420
      %p422 = scmp.eq.s32.totalorder %s421, 0
      %s424 = sadd.s32 %s423, 1
      %s425 = scalar_select %p422, %s423, %s424
      %p428 = pneg %p422
      %p429 = scmp.eq.s32.totalorder %s35, 1
      %p430 = por %p428, %p429
      %p431 = scmp.ne.s32.totalorder %s423, %s426
      %p432 = scmp.eq.s32.totalorder %s35, 0
      %p433 = por %p431, %p432
      %p434 = scmp.ne.s32.totalorder %s423, %s426
      %p435 = scmp.eq.s32.totalorder %s40, 1
      %p436 = por %p434, %p435
      %p437 = scmp.ne.s32.totalorder %s426, %s427
      %p438 = scmp.eq.s32.totalorder %s40, 0
      %p439 = por %p437, %p438
      %p440 = scmp.ne.s32.totalorder %s426, %s427
      %p441 = scmp.eq.s32.totalorder %s41, 1
      %p442 = por %p440, %p441
      %p444 = scmp.ne.s32.totalorder %s427, %s443
      %p445 = scmp.eq.s32.totalorder %s41, 0
      %p446 = por %p444, %p445
      %s447 = ssub.s32 %s42, %s54
      %s448 = ssub.s32 %s43, %s50
      %s449 = sor.u32 %s447, %s448
      %p450 = scmp.eq.s32.totalorder %s449, 0
      %s452 = sadd.s32 %s451, 1
      %s453 = scalar_select %p450, %s451, %s452
      %p456 = pneg %p450
      %p457 = scmp.eq.s32.totalorder %s35, 1
      %p458 = por %p456, %p457
      %p459 = scmp.ne.s32.totalorder %s451, %s454
      %p460 = scmp.eq.s32.totalorder %s35, 0
      %p461 = por %p459, %p460
      %p462 = scmp.ne.s32.totalorder %s451, %s454
      %p463 = scmp.eq.s32.totalorder %s40, 1
      %p464 = por %p462, %p463
      %p465 = scmp.ne.s32.totalorder %s454, %s455
      %p466 = scmp.eq.s32.totalorder %s40, 0
      %p467 = por %p465, %p466
      %p468 = scmp.ne.s32.totalorder %s454, %s455
      %p469 = scmp.eq.s32.totalorder %s41, 1
      %p470 = por %p468, %p469
      %p472 = scmp.ne.s32.totalorder %s455, %s471
      %p473 = scmp.eq.s32.totalorder %s41, 0
      %p474 = por %p472, %p473
      %p475 = scmp.le.s32.totalorder 1, %s35
      %p476 = scmp.lt.s32.totalorder %s35, 3
      %p477 = pnand %p475, %p476
      %p478 = pneg %p477
      // Predicated region
      $region9: #{tpu_custom_call.1} parent=5 // pred_check
        _
      $region10: #{tpu_custom_call.1} parent=5 // pred_check_branch
        %480 = sbr.rel (%p477) target = $region12
      $region11: #{tpu_custom_call.1} parent=5 // pred_region
        %s481 = ssub.s32 %s35, 1
        // Predicated region
        $region13: #{tpu_custom_call.1} parent=11 // pred_check
          %p482 = pneg %p96
        $region14: #{tpu_custom_call.1} parent=11 // pred_check_branch
          %484 = sbr.rel (%p482) target = $region16
        $region15: #{tpu_custom_call.1} parent=11 // pred_region
          _
        $region16: #{tpu_custom_call.1} parent=11 // pred_fallthru
          _
        // Predicated region
        $region17: #{tpu_custom_call.1} parent=11 // pred_check
          %p485 = pneg %p117
        $region18: #{tpu_custom_call.1} parent=11 // pred_check_branch
          %487 = sbr.rel (%p485) target = $region20
        $region19: #{tpu_custom_call.1} parent=11 // pred_region
          _
        $region20: #{tpu_custom_call.1} parent=11 // pred_fallthru
          _
        // Predicated region
        $region21: #{tpu_custom_call.1} parent=11 // pred_check
          %p488 = pneg %p138
        $region22: #{tpu_custom_call.1} parent=11 // pred_check_branch
          %490 = sbr.rel (%p488) target = $region24
        $region23: #{tpu_custom_call.1} parent=11 // pred_region
          _
        $region24: #{tpu_custom_call.1} parent=11 // pred_fallthru
          _
        // Predicated region
        $region25: #{tpu_custom_call.1} parent=11 // pred_check
          %p491 = pneg %p159
        $region26: #{tpu_custom_call.1} parent=11 // pred_check_branch
          %493 = sbr.rel (%p491) target = $region28
        $region27: #{tpu_custom_call.1} parent=11 // pred_region
          _
        $region28: #{tpu_custom_call.1} parent=11 // pred_fallthru
          _
        // Predicated region
        $region29: #{tpu_custom_call.1} parent=11 // pred_check
          %p494 = pneg %p180
        $region30: #{tpu_custom_call.1} parent=11 // pred_check_branch
          %496 = sbr.rel (%p494) target = $region32
        $region31: #{tpu_custom_call.1} parent=11 // pred_region
          _
        $region32: #{tpu_custom_call.1} parent=11 // pred_fallthru
          _
        // Predicated region
        $region33: #{tpu_custom_call.1} parent=11 // pred_check
          %p497 = pneg %p201
        $region34: #{tpu_custom_call.1} parent=11 // pred_check_branch
          %499 = sbr.rel (%p497) target = $region36
        $region35: #{tpu_custom_call.1} parent=11 // pred_region
          _
        $region36: #{tpu_custom_call.1} parent=11 // pred_fallthru
          _
        // Predicated region
        $region37: #{tpu_custom_call.1} parent=11 // pred_check
          %p500 = pneg %p222
        $region38: #{tpu_custom_call.1} parent=11 // pred_check_branch
          %502 = sbr.rel (%p500) target = $region40
        $region39: #{tpu_custom_call.1} parent=11 // pred_region
          _
        $region40: #{tpu_custom_call.1} parent=11 // pred_fallthru
          _
        // Predicated region
        $region41: #{tpu_custom_call.1} parent=11 // pred_check
          %p503 = pneg %p243
        $region42: #{tpu_custom_call.1} parent=11 // pred_check_branch
          %505 = sbr.rel (%p503) target = $region44
        $region43: #{tpu_custom_call.1} parent=11 // pred_region
          _
        $region44: #{tpu_custom_call.1} parent=11 // pred_fallthru
          _
        // Predicated region
        $region45: #{tpu_custom_call.1} parent=11 // pred_check
          %p506 = pneg %p264
        $region46: #{tpu_custom_call.1} parent=11 // pred_check_branch
          %508 = sbr.rel (%p506) target = $region48
        $region47: #{tpu_custom_call.1} parent=11 // pred_region
          _
        $region48: #{tpu_custom_call.1} parent=11 // pred_fallthru
          _
        // Predicated region
        $region49: #{tpu_custom_call.1} parent=11 // pred_check
          %p509 = pneg %p285
        $region50: #{tpu_custom_call.1} parent=11 // pred_check_branch
          %511 = sbr.rel (%p509) target = $region52
        $region51: #{tpu_custom_call.1} parent=11 // pred_region
          _
        $region52: #{tpu_custom_call.1} parent=11 // pred_fallthru
          _
        // Predicated region
        $region53: #{tpu_custom_call.1} parent=11 // pred_check
          %p512 = pneg %p306
        $region54: #{tpu_custom_call.1} parent=11 // pred_check_branch
          %514 = sbr.rel (%p512) target = $region56
        $region55: #{tpu_custom_call.1} parent=11 // pred_region
          _
        $region56: #{tpu_custom_call.1} parent=11 // pred_fallthru
          _
        // Predicated region
        $region57: #{tpu_custom_call.1} parent=11 // pred_check
          %p515 = pneg %p327
        $region58: #{tpu_custom_call.1} parent=11 // pred_check_branch
          %517 = sbr.rel (%p515) target = $region60
        $region59: #{tpu_custom_call.1} parent=11 // pred_region
          _
        $region60: #{tpu_custom_call.1} parent=11 // pred_fallthru
          _
      $region12: #{tpu_custom_call.1} parent=5 // pred_fallthru
        _
      %p518 = scmp.lt.s32.totalorder %s35, 2
      // Predicated region
      $region61: #{tpu_custom_call.1} parent=5 // pred_check
        %p519 = pneg %p518
      $region62: #{tpu_custom_call.1} parent=5 // pred_check_branch
        %521 = sbr.rel (%p519) target = $region64
      $region63: #{tpu_custom_call.1} parent=5 // pred_region
        // Predicated region
        $region65: #{tpu_custom_call.1} parent=63 // pred_check
          %p522 = pneg %p69
        $region66: #{tpu_custom_call.1} parent=63 // pred_check_branch
          %524 = sbr.rel (%p522) target = $region68
        $region67: #{tpu_custom_call.1} parent=63 // pred_region
          %s525 = smul.u32 2, %s43
          %p526 = scmp.lt.s32.totalorder %s42, 1
          %s527 = scalar_select %p526, %s42, 1
          %p528 = scmp.lt.s32.totalorder %s525, 1
          %s529 = scalar_select %p528, %s525, 1
          %s530 = smul.addr %s527, 2
          %s531 = sadd.s32 %s529, %s530
          %s532 = smul.addr %s531, 4
          %s533 = scalar_lea.vmem %s0, %s532
          %s534 = smul.u32 2, %s43
        $region68: #{tpu_custom_call.1} parent=63 // pred_fallthru
          _
      $region64: #{tpu_custom_call.1} parent=5 // pred_fallthru
        _
      %p535 = scmp.le.s32.totalorder 1, %s35
      %p536 = scmp.lt.s32.totalorder %s35, 3
      %p537 = pnand %p535, %p536
      %p538 = pneg %p537
      // Predicated region
      $region69: #{tpu_custom_call.1} parent=5 // pred_check
        _
      $region70: #{tpu_custom_call.1} parent=5 // pred_check_branch
        %540 = sbr.rel (%p537) target = $region72
      $region71: #{tpu_custom_call.1} parent=5 // pred_region
        %s541 = ssub.s32 %s35, 1
        %s542 = smul.u32 2, %s45
        %p543 = scmp.lt.s32.totalorder %s44, 1
        %s544 = scalar_select %p543, %s44, 1
        %p545 = scmp.lt.s32.totalorder %s542, 1
        %s546 = scalar_select %p545, %s542, 1
        %s547 = smul.addr %s544, 2
        %s548 = sadd.s32 %s546, %s547
        %s549 = smul.addr %s548, 4
        %s550 = scalar_lea.vmem %s0, %s549
        %p551 = pneg %p75
        %p552 = pneg %p72
        %p553 = pneg %p96
        %p554 = pneg %p93
        %p555 = pneg %p117
        %p556 = pneg %p114
        %p557 = pneg %p138
        %p558 = pneg %p135
        %p559 = pneg %p159
        %p560 = pneg %p156
        %p561 = pneg %p180
        %p562 = pneg %p177
        %p563 = pneg %p201
        %p564 = pneg %p198
        %p565 = pneg %p222
        %p566 = pneg %p219
        %p567 = pneg %p243
        %p568 = pneg %p240
        %p569 = pneg %p264
        %p570 = pneg %p261
        %p571 = pneg %p285
        %p572 = pneg %p282
        %p573 = pneg %p306
        %p574 = pneg %p303
        %p575 = pneg %p327
        %p576 = pneg %p324
        %p577 = pneg %p355
        %p578 = pneg %p352
        %s579 = sand.u32 %s342, 1
        %s580 = scalar_lea.sflag [#allocation4], %s579
        %s581 = sand.u32 %s342, 1
        %s582 = smul.addr %s581, 4
        %s583 = scalar_lea.vmem [#allocation3], %s582
        %p584 = pneg %p383
        %p585 = pneg %p380
        %s586 = sand.u32 %s40, 1
        %s587 = scalar_lea.sflag [#allocation6], %s586
        %s588 = sand.u32 %s370, 1
        %s589 = smul.addr %s588, 4
        %s590 = scalar_lea.vmem [#allocation5], %s589
        %p591 = pneg %p411
        %p592 = pneg %p408
        %s593 = sand.u32 %s40, 1
        %s594 = scalar_lea.sflag [#allocation6], %s593
        %s595 = sand.u32 %s398, 1
        %s596 = smul.addr %s595, 2
        %s597 = scalar_lea.vmem [#allocation7], %s596
        %p598 = pneg %p439
        %p599 = pneg %p436
        %s600 = smul.u32 2, %s45
        %p601 = scmp.lt.s32.totalorder %s44, 1
        %s602 = scalar_select %p601, %s44, 1
        %p603 = scmp.lt.s32.totalorder %s600, 1
        %s604 = scalar_select %p603, %s600, 1
        %s605 = smul.addr %s602, 2
        %s606 = sadd.s32 %s604, %s605
        %s607 = smul.addr %s606, 4
        %s608 = scalar_lea.vmem %s16, %s607
        %p609 = pneg %p467
        %p610 = pneg %p464
        %s611 = sand.u32 %s454, 1
        %s612 = scalar_lea.sflag [#allocation9], %s611
        %s613 = sand.u32 %s454, 1
        %s614 = smul.addr %s613, 4
        %s615 = scalar_lea.vmem [#allocation8], %s614
        %s616 = smul.u32 2, %s45
        %p617 = scmp.lt.s32.totalorder %s44, 1
        %s618 = scalar_select %p617, %s44, 1
        %p619 = scmp.lt.s32.totalorder %s616, 1
        %s620 = scalar_select %p619, %s616, 1
        %s621 = smul.addr %s618, 2
        %s622 = sadd.s32 %s620, %s621
        %s623 = smul.addr %s622, 4
        %s624 = scalar_lea.vmem %s0, %s623
        %s625 = smul.u32 2, %s45
        %s626 = smul.u32 2, %s45
        %s627 = smul.u32 2, %s45
        %s628 = smul.u32 2, %s45
        %s629 = smul.u32 2, %s45
        %p630 = scmp.lt.s32.totalorder %s44, 1
        %s631 = scalar_select %p630, %s44, 1
        %p632 = scmp.lt.s32.totalorder %s629, 1
        %s633 = scalar_select %p632, %s629, 1
        %s634 = smul.addr %s631, 2
        %s635 = sadd.s32 %s633, %s634
        %s636 = smul.addr %s635, 4
        %s637 = scalar_lea.vmem %s16, %s636
        %s638 = smul.u32 2, %s45
        %s639 = smul.u32 2, %s45
        %v641 = vld [vmem:[%s624] sm:$0xff]
        %v642 = vld [vmem:[%s1] sm:$0xff]
        %v643 = vld [vmem:[%s2] sm:$0xff]
        %v644 = vld [vmem:[%s2 + $0x8] sm:$0xff]
        %v645 = vld [vmem:[%s2 + $0x10] sm:$0xff]
        %v646 = vld [vmem:[%s2 + $0x18] sm:$0xff]
        %v647 = vld [vmem:[%s2 + $0x20] sm:$0xff]
        %v648 = vld [vmem:[%s2 + $0x28] sm:$0xff]
        %v649 = vld [vmem:[%s2 + $0x30] sm:$0xff]
        %v650 = vld [vmem:[%s2 + $0x38] sm:$0xff]
        %v651 = vld [vmem:[%s2 + $0x40] sm:$0xff]
        %v652 = vld [vmem:[%s2 + $0x48] sm:$0xff]
        %v653 = vld [vmem:[%s2 + $0x50] sm:$0xff]
        %v654 = vld [vmem:[%s2 + $0x58] sm:$0xff]
        %v655 = vld [vmem:[%s2 + $0x60] sm:$0xff]
        %v656 = vld [vmem:[%s2 + $0x68] sm:$0xff]
        %v657 = vld [vmem:[%s2 + $0x70] sm:$0xff]
        %v658 = vld [vmem:[%s2 + $0x78] sm:$0xff]
        %v659 = vld [vmem:[%s2 + $0x80] sm:$0xff]
        %v660 = vld [vmem:[%s2 + $0x88] sm:$0xff]
        %v661 = vld [vmem:[%s2 + $0x90] sm:$0xff]
        %v662 = vld [vmem:[%s2 + $0x98] sm:$0xff]
        %664 = vset.pattern.permute.xlu0 0
        %665 = vperm.xlu0 %664, %v643
        %v666 = vpop.permute.xlu0 %665
        %669 = vset.pattern.permute.xlu0 0
        %670 = vperm.xlu0 %669, %v644
        %v671 = vpop.permute.xlu0 %670
        %674 = vset.pattern.permute.xlu0 0
        %675 = vperm.xlu0 %674, %v645
        %v676 = vpop.permute.xlu0 %675
        %679 = vset.pattern.permute.xlu0 0
        %680 = vperm.xlu0 %679, %v646
        %v681 = vpop.permute.xlu0 %680
        %684 = vset.pattern.permute.xlu0 0
        %685 = vperm.xlu0 %684, %v647
        %v686 = vpop.permute.xlu0 %685
        %689 = vset.pattern.permute.xlu0 0
        %690 = vperm.xlu0 %689, %v648
        %v691 = vpop.permute.xlu0 %690
        %694 = vset.pattern.permute.xlu0 0
        %695 = vperm.xlu0 %694, %v649
        %v696 = vpop.permute.xlu0 %695
        %699 = vset.pattern.permute.xlu0 0
        %700 = vperm.xlu0 %699, %v650
        %v701 = vpop.permute.xlu0 %700
        %704 = vset.pattern.permute.xlu0 0
        %705 = vperm.xlu0 %704, %v651
        %v706 = vpop.permute.xlu0 %705
        %709 = vset.pattern.permute.xlu0 0
        %710 = vperm.xlu0 %709, %v652
        %v711 = vpop.permute.xlu0 %710
        %714 = vset.pattern.permute.xlu0 0
        %715 = vperm.xlu0 %714, %v653
        %v716 = vpop.permute.xlu0 %715
        %719 = vset.pattern.permute.xlu0 0
        %720 = vperm.xlu0 %719, %v654
        %v721 = vpop.permute.xlu0 %720
        %724 = vset.pattern.permute.xlu0 0
        %725 = vperm.xlu0 %724, %v655
        %v726 = vpop.permute.xlu0 %725
        %729 = vset.pattern.permute.xlu0 0
        %730 = vperm.xlu0 %729, %v656
        %v731 = vpop.permute.xlu0 %730
        %734 = vset.pattern.permute.xlu0 0
        %735 = vperm.xlu0 %734, %v657
        %v736 = vpop.permute.xlu0 %735
        %739 = vset.pattern.permute.xlu0 0
        %740 = vperm.xlu0 %739, %v658
        %v741 = vpop.permute.xlu0 %740
        %744 = vset.pattern.permute.xlu0 0
        %745 = vperm.xlu0 %744, %v659
        %v746 = vpop.permute.xlu0 %745
        %749 = vset.pattern.permute.xlu0 0
        %750 = vperm.xlu0 %749, %v660
        %v751 = vpop.permute.xlu0 %750
        %754 = vset.pattern.permute.xlu0 0
        %755 = vperm.xlu0 %754, %v661
        %v756 = vpop.permute.xlu0 %755
        %759 = vset.pattern.permute.xlu0 0
        %760 = vperm.xlu0 %759, %v662
        %v761 = vpop.permute.xlu0 %760
        %v764 = vunpack.c.l.b16 %v642
        %v765 = vunpack.c.h.b16 %v642
        %v766 = vpack.c.b16 %v764, %v764
        %v767 = vpack.c.b16 %v765, %v765
        %770 = vxpose.xlu0.c.b16.start [1/8] %v766, 128
        %771 = vxpose.xlu0.c.b16.cont [2/8] 0, 128
        %772 = vxpose.xlu0.c.b16.cont [3/8] 0, 128
        %773 = vxpose.xlu0.c.b16.cont [4/8] 0, 128
        %774 = vxpose.xlu0.c.b16.cont [5/8] 0, 128
        %775 = vxpose.xlu0.c.b16.cont [6/8] 0, 128
        %776 = vxpose.xlu0.c.b16.cont [7/8] 0, 128
        %777 = vxpose.xlu0.c.b16.end [8/8] 0, 128
        %v778 = vpop.trf.xlu0
        %v779 = vpop.trf.xlu0
        %v780 = vpop.trf.xlu0
        %v781 = vpop.trf.xlu0
        %v782 = vpop.trf.xlu0
        %v783 = vpop.trf.xlu0
        %v784 = vpop.trf.xlu0
        %v785 = vpop.trf.xlu0
        %786 = vxpose.xlu0.c.b16.start [1/8] %v767, 128
        %787 = vxpose.xlu0.c.b16.cont [2/8] 0, 128
        %788 = vxpose.xlu0.c.b16.cont [3/8] 0, 128
        %789 = vxpose.xlu0.c.b16.cont [4/8] 0, 128
        %790 = vxpose.xlu0.c.b16.cont [5/8] 0, 128
        %791 = vxpose.xlu0.c.b16.cont [6/8] 0, 128
        %792 = vxpose.xlu0.c.b16.cont [7/8] 0, 128
        %793 = vxpose.xlu0.c.b16.end [8/8] 0, 128
        %v794 = vpop.trf.xlu0
        %v795 = vpop.trf.xlu0
        %v796 = vpop.trf.xlu0
        %v797 = vpop.trf.xlu0
        %v798 = vpop.trf.xlu0
        %v799 = vpop.trf.xlu0
        %v800 = vpop.trf.xlu0
        %v801 = vpop.trf.xlu0
        %v803 = vunpack.c.l.b16 %v641
        %v804 = vunpack.c.h.b16 %v641
        %v805 = vpack.c.b16 %v803, %v803
        %v806 = vpack.c.b16 %v804, %v804
        %vm807 = vcmask 64512
        %v809 = vsel %vm807, %v778, 0
        %v812 = vsel %vm807, %v779, 0
        %v815 = vsel %vm807, %v780, 0
        %v818 = vsel %vm807, %v781, 0
        %v821 = vsel %vm807, %v782, 0
        %v824 = vsel %vm807, %v783, 0
        %v827 = vsel %vm807, %v784, 0
        %v830 = vsel %vm807, %v785, 0
        %v833 = vsel %vm807, %v794, 0
        %v836 = vsel %vm807, %v795, 0
        %vm838 = vcmask 1043456
        %v840 = vsel %vm838, %v805, 0
        %v843 = vsel %vm838, %v806, 0
        %845 = vmatprep.subr.bf16.mxu0 %v843
        %846 = vmatpush1.bf16.msra.mxu0 %v840
        %847 = vmatprep.subr.bf16.mxu0 0
        %848 = vmatpush1.bf16.msra.mxu0 0
        %849 = vmatprep.subr.bf16.mxu0 0
        %850 = vmatpush1.bf16.msra.mxu0 0
        %851 = vmatprep.subr.bf16.mxu0 0
        %852 = vmatpush1.bf16.msra.mxu0 0
        %853 = vmatprep.subr.bf16.mxu0 0
        %854 = vmatpush1.bf16.msra.mxu0 0
        %855 = vmatprep.subr.bf16.mxu0 0
        %856 = vmatpush1.bf16.msra.mxu0 0
        %857 = vmatprep.subr.bf16.mxu0 0
        %858 = vmatpush1.bf16.msra.mxu0 0
        %859 = vmatprep.subr.bf16.mxu0 0
        %860 = vmatpush1.bf16.msra.mxu0 0
        %861 = vmatprep.subr.bf16.mxu0 0
        %862 = vmatpush1.bf16.msra.mxu0 0
        %863 = vmatprep.subr.bf16.mxu0 0
        %864 = vmatpush1.bf16.msra.mxu0 0
        %865 = vmatprep.subr.bf16.mxu0 0
        %866 = vmatpush1.bf16.msra.mxu0 0
        %867 = vmatprep.subr.bf16.mxu0 0
        %868 = vmatpush1.bf16.msra.mxu0 0
        %869 = vmatprep.subr.bf16.mxu0 0
        %870 = vmatpush1.bf16.msra.mxu0 0
        %871 = vmatprep.subr.bf16.mxu0 0
        %872 = vmatpush1.bf16.msra.mxu0 0
        %873 = vmatprep.subr.bf16.mxu0 0
        %874 = vmatpush1.bf16.msra.mxu0 0
        %875 = vmatprep.subr.bf16.mxu0 0
        %876 = vmatpush1.bf16.msra.mxu0 0
        %877 = vmatprep.mubr.bf16.mxu0 0
        %878 = vmatmul.mubr.bf16.gmra.mrb[0].mxu0 %v809
        %v879 = vpop.f32.mrb[0].mxu0
        %v880 = vadd.f32 %v666, %v879
        %v881 = vpop.f32.mrb[0].mxu0
        %v882 = vadd.f32 %v666, %v881
        %v883 = vpop.f32.mrb[0].mxu0
        %v884 = vadd.f32 %v671, %v883
        %v885 = vpop.f32.mrb[0].mxu0
        %v886 = vadd.f32 %v671, %v885
        %887 = vmatprep.mubr.bf16.mxu0 0
        %888 = vmatmul.mubr.bf16.gmra.mrb[0].mxu0 %v812
        %v889 = vpop.f32.mrb[0].mxu0
        %v890 = vadd.f32 %v676, %v889
        %v891 = vpop.f32.mrb[0].mxu0
        %v892 = vadd.f32 %v676, %v891
        %v893 = vpop.f32.mrb[0].mxu0
        %v894 = vadd.f32 %v681, %v893
        %v895 = vpop.f32.mrb[0].mxu0
        %v896 = vadd.f32 %v681, %v895
        %897 = vmatprep.mubr.bf16.mxu0 0
        %898 = vmatmul.mubr.bf16.gmra.mrb[0].mxu0 %v815
        %v899 = vpop.f32.mrb[0].mxu0
        %v900 = vadd.f32 %v686, %v899
        %v901 = vpop.f32.mrb[0].mxu0
        %v902 = vadd.f32 %v686, %v901
        %v903 = vpop.f32.mrb[0].mxu0
        %v904 = vadd.f32 %v691, %v903
        %v905 = vpop.f32.mrb[0].mxu0
        %v906 = vadd.f32 %v691, %v905
        %907 = vmatprep.mubr.bf16.mxu0 0
        %908 = vmatmul.mubr.bf16.gmra.mrb[0].mxu0 %v818
        %v909 = vpop.f32.mrb[0].mxu0
        %v910 = vadd.f32 %v696, %v909
        %v911 = vpop.f32.mrb[0].mxu0
        %v912 = vadd.f32 %v696, %v911
        %v913 = vpop.f32.mrb[0].mxu0
        %v914 = vadd.f32 %v701, %v913
        %v915 = vpop.f32.mrb[0].mxu0
        %v916 = vadd.f32 %v701, %v915
        %917 = vmatprep.mubr.bf16.mxu0 0
        %918 = vmatmul.mubr.bf16.gmra.mrb[0].mxu0 %v821
        %v919 = vpop.f32.mrb[0].mxu0
        %v920 = vadd.f32 %v706, %v919
        %v921 = vpop.f32.mrb[0].mxu0
        %v922 = vadd.f32 %v706, %v921
        %v923 = vpop.f32.mrb[0].mxu0
        %v924 = vadd.f32 %v711, %v923
        %v925 = vpop.f32.mrb[0].mxu0
        %v926 = vadd.f32 %v711, %v925
        %927 = vmatprep.mubr.bf16.mxu0 0
        %928 = vmatmul.mubr.bf16.gmra.mrb[0].mxu0 %v824
        %v929 = vpop.f32.mrb[0].mxu0
        %v930 = vadd.f32 %v716, %v929
        %v931 = vpop.f32.mrb[0].mxu0
        %v932 = vadd.f32 %v716, %v931
        %v933 = vpop.f32.mrb[0].mxu0
        %v934 = vadd.f32 %v721, %v933
        %v935 = vpop.f32.mrb[0].mxu0
        %v936 = vadd.f32 %v721, %v935
        %937 = vmatprep.mubr.bf16.mxu0 0
        %938 = vmatmul.mubr.bf16.gmra.mrb[0].mxu0 %v827
        %v939 = vpop.f32.mrb[0].mxu0
        %v940 = vadd.f32 %v726, %v939
        %v941 = vpop.f32.mrb[0].mxu0
        %v942 = vadd.f32 %v726, %v941
        %v943 = vpop.f32.mrb[0].mxu0
        %v944 = vadd.f32 %v731, %v943
        %v945 = vpop.f32.mrb[0].mxu0
        %v946 = vadd.f32 %v731, %v945
        %947 = vmatprep.mubr.bf16.mxu0 0
        %948 = vmatmul.mubr.bf16.gmra.mrb[0].mxu0 %v830
        %v949 = vpop.f32.mrb[0].mxu0
        %v950 = vadd.f32 %v736, %v949
        %v951 = vpop.f32.mrb[0].mxu0
        %v952 = vadd.f32 %v736, %v951
        %v953 = vpop.f32.mrb[0].mxu0
        %v954 = vadd.f32 %v741, %v953
        %v955 = vpop.f32.mrb[0].mxu0
        %v956 = vadd.f32 %v741, %v955
        %957 = vmatprep.mubr.bf16.mxu0 0
        %958 = vmatmul.mubr.bf16.gmra.mrb[0].mxu0 %v833
        %v959 = vpop.f32.mrb[0].mxu0
        %v960 = vadd.f32 %v746, %v959
        %v961 = vpop.f32.mrb[0].mxu0
        %v962 = vadd.f32 %v746, %v961
        %v963 = vpop.f32.mrb[0].mxu0
        %v964 = vadd.f32 %v751, %v963
        %v965 = vpop.f32.mrb[0].mxu0
        %v966 = vadd.f32 %v751, %v965
        %967 = vmatprep.mubr.bf16.mxu0 0
        %968 = vmatmul.mubr.bf16.gmra.mrb[0].mxu0 %v836
        %v969 = vpop.f32.mrb[0].mxu0
        %v970 = vadd.f32 %v756, %v969
        %v971 = vpop.f32.mrb[0].mxu0
        %v972 = vadd.f32 %v756, %v971
        %v973 = vpop.f32.mrb[0].mxu0
        %v974 = vadd.f32 %v761, %v973
        %v975 = vpop.f32.mrb[0].mxu0
        %v976 = vadd.f32 %v761, %v975
        %977 = vdwg.mxu0
        %v978 = vmax.f32 %v880, 0.0
        %v979 = vmax.f32 %v882, 0.0
        %v980 = vmax.f32 %v884, 0.0
        %v981 = vmax.f32 %v886, 0.0
        %v982 = vmax.f32 %v890, 0.0
        %v983 = vmax.f32 %v892, 0.0
        %v984 = vmax.f32 %v894, 0.0
        %v985 = vmax.f32 %v896, 0.0
        %v986 = vmax.f32 %v900, 0.0
        %v987 = vmax.f32 %v902, 0.0
        %v988 = vmax.f32 %v904, 0.0
        %v989 = vmax.f32 %v906, 0.0
        %v990 = vmax.f32 %v910, 0.0
        %v991 = vmax.f32 %v912, 0.0
        %v992 = vmax.f32 %v914, 0.0
        %v993 = vmax.f32 %v916, 0.0
        %v994 = vmax.f32 %v920, 0.0
        %v995 = vmax.f32 %v922, 0.0
        %v996 = vmax.f32 %v924, 0.0
        %v997 = vmax.f32 %v926, 0.0
        %v998 = vmax.f32 %v930, 0.0
        %v999 = vmax.f32 %v932, 0.0
        %v1000 = vmax.f32 %v934, 0.0
        %v1001 = vmax.f32 %v936, 0.0
        %v1002 = vmax.f32 %v940, 0.0
        %v1003 = vmax.f32 %v942, 0.0
        %v1004 = vmax.f32 %v944, 0.0
        %v1005 = vmax.f32 %v946, 0.0
        %v1006 = vmax.f32 %v950, 0.0
        %v1007 = vmax.f32 %v952, 0.0
        %v1008 = vmax.f32 %v954, 0.0
        %v1009 = vmax.f32 %v956, 0.0
        %v1010 = vmax.f32 %v960, 0.0
        %v1011 = vmax.f32 %v962, 0.0
        %v1012 = vmax.f32 %v964, 0.0
        %v1013 = vmax.f32 %v966, 0.0
        %v1014 = vmax.f32 %v970, 0.0
        %v1015 = vmax.f32 %v972, 0.0
        %v1016 = vmax.f32 %v974, 0.0
        %v1017 = vmax.f32 %v976, 0.0
        %v1018 = vpack.c.bf16 %v980, %v978
        %v1019 = vpack.c.bf16 %v981, %v979
        %v1020 = vpack.c.bf16 %v984, %v982
        %v1021 = vpack.c.bf16 %v985, %v983
        %v1022 = vpack.c.bf16 %v988, %v986
        %v1023 = vpack.c.bf16 %v989, %v987
        %v1024 = vpack.c.bf16 %v992, %v990
        %v1025 = vpack.c.bf16 %v993, %v991
        %v1026 = vpack.c.bf16 %v996, %v994
        %v1027 = vpack.c.bf16 %v997, %v995
        %v1028 = vpack.c.bf16 %v1000, %v998
        %v1029 = vpack.c.bf16 %v1001, %v999
        %v1030 = vpack.c.bf16 %v1004, %v1002
        %v1031 = vpack.c.bf16 %v1005, %v1003
        %v1032 = vpack.c.bf16 %v1008, %v1006
        %v1033 = vpack.c.bf16 %v1009, %v1007
        %v1034 = vpack.c.bf16 %v1012, %v1010
        %v1035 = vpack.c.bf16 %v1013, %v1011
        %v1036 = vpack.c.bf16 %v1016, %v1014
        %v1037 = vpack.c.bf16 %v1017, %v1015
        %v1038 = vld [vmem:[%s3] sm:$0xf]
        %v1039 = vld [vmem:[%s3 + $0x4] sm:$0xf]
        %v1040 = vld [vmem:[%s3 + $0x8] sm:$0xf]
        %v1041 = vld [vmem:[%s3 + $0xc] sm:$0xf]
        %v1042 = vld [vmem:[%s4] sm:$0x3]
        %1044 = vset.pattern.permute.xlu0 0
        %1045 = vperm.xlu0 %1044, %v1042
        %v1046 = vpop.permute.xlu0 %1045
        %v1052 = vunpack.c.l.b16 %v1038
        %v1053 = vunpack.c.l.b16 %v1039
        %v1054 = vunpack.c.l.b16 %v1040
        %v1055 = vunpack.c.l.b16 %v1041
        %v1056 = vpack.c.b16 %v1053, %v1052
        %v1057 = vpack.c.b16 %v1055, %v1054
        %1060 = vxpose.xlu0.c.b16.start [1/8] %v1056, 128
        %1061 = vxpose.xlu0.c.b16.cont [2/8] %v1057, 128
        %1062 = vxpose.xlu0.c.b16.cont [3/8] 0, 128
        %1063 = vxpose.xlu0.c.b16.cont [4/8] 0, 128
        %1064 = vxpose.xlu0.c.b16.cont [5/8] 0, 128
        %1065 = vxpose.xlu0.c.b16.cont [6/8] 0, 128
        %1066 = vxpose.xlu0.c.b16.cont [7/8] 0, 128
        %1067 = vxpose.xlu0.c.b16.end [8/8] 0, 128
        %v1068 = vpop.trf.xlu0
        %v1069 = vpop.trf.xlu0
        %v1070 = vpop.trf.xlu0
        %v1071 = vpop.trf.xlu0
        %v1072 = vpop.trf.xlu0
        %v1073 = vpop.trf.xlu0
        %v1074 = vpop.trf.xlu0
        %v1075 = vpop.trf.xlu0
        %vm1076 = vcmask 261120
        %v1078 = vsel %vm1076, %v1068, 0
        %1080 = vmatprep.subr.bf16.mxu0 %v1019
        %1081 = vmatpush1.bf16.msra.mxu0 %v1018
        %1082 = vmatprep.subr.bf16.mxu0 %v1021
        %1083 = vmatpush1.bf16.msra.mxu0 %v1020
        %1084 = vmatprep.subr.bf16.mxu0 0
        %1085 = vmatpush1.bf16.msra.mxu0 0
        %1086 = vmatprep.subr.bf16.mxu0 0
        %1087 = vmatpush1.bf16.msra.mxu0 0
        %1088 = vmatprep.subr.bf16.mxu0 0
        %1089 = vmatpush1.bf16.msra.mxu0 0
        %1090 = vmatprep.subr.bf16.mxu0 0
        %1091 = vmatpush1.bf16.msra.mxu0 0
        %1092 = vmatprep.subr.bf16.mxu0 0
        %1093 = vmatpush1.bf16.msra.mxu0 0
        %1094 = vmatprep.subr.bf16.mxu0 0
        %1095 = vmatpush1.bf16.msra.mxu0 0
        %1096 = vmatprep.subr.bf16.mxu0 0
        %1097 = vmatpush1.bf16.msra.mxu0 0
        %1098 = vmatprep.subr.bf16.mxu0 0
        %1099 = vmatpush1.bf16.msra.mxu0 0
        %1100 = vmatprep.subr.bf16.mxu0 0
        %1101 = vmatpush1.bf16.msra.mxu0 0
        %1102 = vmatprep.subr.bf16.mxu0 0
        %1103 = vmatpush1.bf16.msra.mxu0 0
        %1104 = vmatprep.subr.bf16.mxu0 0
        %1105 = vmatpush1.bf16.msra.mxu0 0
        %1106 = vmatprep.subr.bf16.mxu0 0
        %1107 = vmatpush1.bf16.msra.mxu0 0
        %1108 = vmatprep.subr.bf16.mxu0 0
        %1109 = vmatpush1.bf16.msra.mxu0 0
        %1110 = vmatprep.subr.bf16.mxu0 0
        %1111 = vmatpush1.bf16.msra.mxu0 0
        %1112 = vmatprep.mubr.bf16.mxu0 0
        %1113 = vmatmul.mubr.bf16.gmra.mrb[0].mxu0 %v1078
        %v1114 = vpop.f32.mrb[0].mxu0
        %v1115 = vadd.f32 %v1046, %v1114
        %v1116 = vpop.f32.mrb[0].mxu0
        %v1117 = vadd.f32 %v1046, %v1116
        %v1118 = vpop.f32.mrb[0].mxu0
        %v1119 = vpop.f32.mrb[0].mxu0
        %1120 = vdwg.mxu0
        %v1123 = vcombine.low %v1115, %v1117
        %v1125 = vunpack.c.l.s4 1983009808
        %v1126 = vunpack.c.0.s8 %v1125
        %v1127 = vlaneseq
        %v1128 = vshrl.u32 %v1127, 7
        %v1129 = vsub.s32 %v1126, %v1128
        %v1130 = vrot.slane %v1123, %v1129
        %1132 = vst [vmem:[%s583] sm:$0xf] %v1130
        %v1133 = vld [vmem:[%s5] sm:$0xf]
        %v1134 = vld [vmem:[%s5 + $0x4] sm:$0xf]
        %v1135 = vld [vmem:[%s5 + $0x8] sm:$0xf]
        %v1136 = vld [vmem:[%s5 + $0xc] sm:$0xf]
        %v1137 = vld [vmem:[%s6] sm:$0x3]
        %1139 = vset.pattern.permute.xlu0 0
        %1140 = vperm.xlu0 %1139, %v1137
        %v1141 = vpop.permute.xlu0 %1140
        %v1147 = vunpack.c.l.b16 %v1133
        %v1148 = vunpack.c.l.b16 %v1134
        %v1149 = vunpack.c.l.b16 %v1135
        %v1150 = vunpack.c.l.b16 %v1136
        %v1151 = vpack.c.b16 %v1148, %v1147
        %v1152 = vpack.c.b16 %v1150, %v1149
        %1155 = vxpose.xlu0.c.b16.start [1/8] %v1151, 128
        %1156 = vxpose.xlu0.c.b16.cont [2/8] %v1152, 128
        %1157 = vxpose.xlu0.c.b16.cont [3/8] 0, 128
        %1158 = vxpose.xlu0.c.b16.cont [4/8] 0, 128
        %1159 = vxpose.xlu0.c.b16.cont [5/8] 0, 128
        %1160 = vxpose.xlu0.c.b16.cont [6/8] 0, 128
        %1161 = vxpose.xlu0.c.b16.cont [7/8] 0, 128
        %1162 = vxpose.xlu0.c.b16.end [8/8] 0, 128
        %v1163 = vpop.trf.xlu0
        %v1164 = vpop.trf.xlu0
        %v1165 = vpop.trf.xlu0
        %v1166 = vpop.trf.xlu0
        %v1167 = vpop.trf.xlu0
        %v1168 = vpop.trf.xlu0
        %v1169 = vpop.trf.xlu0
        %v1170 = vpop.trf.xlu0
        %v1172 = vsel %vm1076, %v1163, 0
        %1174 = vmatprep.subr.bf16.mxu0 %v1023
        %1175 = vmatpush1.bf16.msra.mxu0 %v1022
        %1176 = vmatprep.subr.bf16.mxu0 %v1025
        %1177 = vmatpush1.bf16.msra.mxu0 %v1024
        %1178 = vmatprep.subr.bf16.mxu0 0
        %1179 = vmatpush1.bf16.msra.mxu0 0
        %1180 = vmatprep.subr.bf16.mxu0 0
        %1181 = vmatpush1.bf16.msra.mxu0 0
        %1182 = vmatprep.subr.bf16.mxu0 0
        %1183 = vmatpush1.bf16.msra.mxu0 0
        %1184 = vmatprep.subr.bf16.mxu0 0
        %1185 = vmatpush1.bf16.msra.mxu0 0
        %1186 = vmatprep.subr.bf16.mxu0 0
        %1187 = vmatpush1.bf16.msra.mxu0 0
        %1188 = vmatprep.subr.bf16.mxu0 0
        %1189 = vmatpush1.bf16.msra.mxu0 0
        %1190 = vmatprep.subr.bf16.mxu0 0
        %1191 = vmatpush1.bf16.msra.mxu0 0
        %1192 = vmatprep.subr.bf16.mxu0 0
        %1193 = vmatpush1.bf16.msra.mxu0 0
        %1194 = vmatprep.subr.bf16.mxu0 0
        %1195 = vmatpush1.bf16.msra.mxu0 0
        %1196 = vmatprep.subr.bf16.mxu0 0
        %1197 = vmatpush1.bf16.msra.mxu0 0
        %1198 = vmatprep.subr.bf16.mxu0 0
        %1199 = vmatpush1.bf16.msra.mxu0 0
        %1200 = vmatprep.subr.bf16.mxu0 0
        %1201 = vmatpush1.bf16.msra.mxu0 0
        %1202 = vmatprep.subr.bf16.mxu0 0
        %1203 = vmatpush1.bf16.msra.mxu0 0
        %1204 = vmatprep.subr.bf16.mxu0 0
        %1205 = vmatpush1.bf16.msra.mxu0 0
        %1206 = vmatprep.mubr.bf16.mxu0 0
        %1207 = vmatmul.mubr.bf16.gmra.mrb[0].mxu0 %v1172
        %v1208 = vpop.f32.mrb[0].mxu0
        %v1209 = vadd.f32 %v1141, %v1208
        %v1210 = vpop.f32.mrb[0].mxu0
        %v1211 = vadd.f32 %v1141, %v1210
        %v1212 = vpop.f32.mrb[0].mxu0
        %v1213 = vpop.f32.mrb[0].mxu0
        %1214 = vdwg.mxu0
        %v1217 = vcombine.low %v1209, %v1211
        %v1219 = vunpack.c.l.s4 1983009808
        %v1220 = vunpack.c.0.s8 %v1219
        %v1221 = vlaneseq
        %v1222 = vshrl.u32 %v1221, 7
        %v1223 = vsub.s32 %v1220, %v1222
        %v1224 = vrot.slane %v1217, %v1223
        %1226 = vst [vmem:[%s590] sm:$0xf] %v1224
        %v1227 = vld [vmem:[%s7] sm:$0xf]
        %v1228 = vld [vmem:[%s7 + $0x4] sm:$0xf]
        %v1229 = vld [vmem:[%s7 + $0x8] sm:$0xf]
        %v1230 = vld [vmem:[%s7 + $0xc] sm:$0xf]
        %v1231 = vld [vmem:[#allocation2] sm:$0x1]
        %1233 = vset.pattern.permute.xlu0 0
        %1234 = vperm.xlu0 %1233, %v1231
        %v1235 = vpop.permute.xlu0 %1234
        %v1237 = vlaneseq
        %v1238 = vshrl.u32 %v1237, 7
        %v1239 = vsub.s32 0, %v1238
        %v1240 = vrot.slane %v1235, %v1239
        %v1245 = vunpack.c.l.b16 %v1227
        %v1246 = vunpack.c.l.b16 %v1228
        %v1247 = vunpack.c.l.b16 %v1229
        %v1248 = vunpack.c.l.b16 %v1230
        %v1249 = vpack.c.b16 %v1246, %v1245
        %v1250 = vpack.c.b16 %v1248, %v1247
        %1253 = vxpose.xlu0.c.b16.start [1/8] %v1249, 128
        %1254 = vxpose.xlu0.c.b16.cont [2/8] %v1250, 128
        %1255 = vxpose.xlu0.c.b16.cont [3/8] 0, 128
        %1256 = vxpose.xlu0.c.b16.cont [4/8] 0, 128
        %1257 = vxpose.xlu0.c.b16.cont [5/8] 0, 128
        %1258 = vxpose.xlu0.c.b16.cont [6/8] 0, 128
        %1259 = vxpose.xlu0.c.b16.cont [7/8] 0, 128
        %1260 = vxpose.xlu0.c.b16.end [8/8] 0, 128
        %v1261 = vpop.trf.xlu0
        %v1262 = vpop.trf.xlu0
        %v1263 = vpop.trf.xlu0
        %v1264 = vpop.trf.xlu0
        %v1265 = vpop.trf.xlu0
        %v1266 = vpop.trf.xlu0
        %v1267 = vpop.trf.xlu0
        %v1268 = vpop.trf.xlu0
        %v1270 = vsel %vm1076, %v1261, 0
        %1272 = vmatprep.subr.bf16.mxu0 %v1027
        %1273 = vmatpush1.bf16.msra.mxu0 %v1026
        %1274 = vmatprep.subr.bf16.mxu0 %v1029
        %1275 = vmatpush1.bf16.msra.mxu0 %v1028
        %1276 = vmatprep.subr.bf16.mxu0 0
        %1277 = vmatpush1.bf16.msra.mxu0 0
        %1278 = vmatprep.subr.bf16.mxu0 0
        %1279 = vmatpush1.bf16.msra.mxu0 0
        %1280 = vmatprep.subr.bf16.mxu0 0
        %1281 = vmatpush1.bf16.msra.mxu0 0
        %1282 = vmatprep.subr.bf16.mxu0 0
        %1283 = vmatpush1.bf16.msra.mxu0 0
        %1284 = vmatprep.subr.bf16.mxu0 0
        %1285 = vmatpush1.bf16.msra.mxu0 0
        %1286 = vmatprep.subr.bf16.mxu0 0
        %1287 = vmatpush1.bf16.msra.mxu0 0
        %1288 = vmatprep.subr.bf16.mxu0 0
        %1289 = vmatpush1.bf16.msra.mxu0 0
        %1290 = vmatprep.subr.bf16.mxu0 0
        %1291 = vmatpush1.bf16.msra.mxu0 0
        %1292 = vmatprep.subr.bf16.mxu0 0
        %1293 = vmatpush1.bf16.msra.mxu0 0
        %1294 = vmatprep.subr.bf16.mxu0 0
        %1295 = vmatpush1.bf16.msra.mxu0 0
        %1296 = vmatprep.subr.bf16.mxu0 0
        %1297 = vmatpush1.bf16.msra.mxu0 0
        %1298 = vmatprep.subr.bf16.mxu0 0
        %1299 = vmatpush1.bf16.msra.mxu0 0
        %1300 = vmatprep.subr.bf16.mxu0 0
        %1301 = vmatpush1.bf16.msra.mxu0 0
        %1302 = vmatprep.subr.bf16.mxu0 0
        %1303 = vmatpush1.bf16.msra.mxu0 0
        %1304 = vmatprep.mubr.bf16.mxu0 0
        %1305 = vmatmul.mubr.bf16.gmra.mrb[0].mxu0 %v1270
        %v1306 = vpop.f32.mrb[0].mxu0
        %v1307 = vadd.f32 %v1240, %v1306
        %v1308 = vpop.f32.mrb[0].mxu0
        %v1309 = vadd.f32 %v1240, %v1308
        %v1310 = vpop.f32.mrb[0].mxu0
        %v1311 = vpop.f32.mrb[0].mxu0
        %1312 = vdwg.mxu0
        %v1315 = vcombine.low %v1307, %v1309
        %v1317 = vunpack.c.l.s4 1966171168
        %v1318 = vunpack.c.0.s8 %v1317
        %v1319 = vlaneseq
        %v1320 = vshrl.u32 %v1319, 7
        %v1321 = vsub.s32 %v1318, %v1320
        %v1322 = vrot.slane %v1315, %v1321
        %v1324 = vunpack.c.l.s4 1966171168
        %v1325 = vunpack.c.0.s8 %v1324
        %v1326 = vlaneseq
        %v1327 = vshrl.u32 %v1326, 7
        %v1328 = vsub.s32 %v1325, %v1327
        %v1329 = vrot.slane %v1322, %v1328
        %v1331 = vlaneseq
        %vm1332 = vcmp.ge.s32.totalorder %v1331, 0
        %vm1333 = vcmp.lt.s32.totalorder %v1331, 256
        %vm1334 = vmand %vm1332, %vm1333
        %1335 = vst.msk [vmem:[%s597] sm:$0x3] %vm1334, %v1329
        %v1336 = vld [vmem:[%s9] sm:$0xf]
        %v1337 = vld [vmem:[%s9 + $0x4] sm:$0xf]
        %v1338 = vld [vmem:[%s9 + $0x8] sm:$0xf]
        %v1339 = vld [vmem:[%s9 + $0xc] sm:$0xf]
        %v1340 = vld [vmem:[%s10] sm:$0x7]
        %1342 = vset.pattern.permute.xlu0 0
        %1343 = vperm.xlu0 %1342, %v1340
        %v1344 = vpop.permute.xlu0 %1343
        %v1350 = vunpack.c.l.b16 %v1336
        %v1351 = vunpack.c.l.b16 %v1337
        %v1352 = vunpack.c.l.b16 %v1338
        %v1353 = vunpack.c.l.b16 %v1339
        %v1354 = vpack.c.b16 %v1351, %v1350
        %v1355 = vpack.c.b16 %v1353, %v1352
        %1358 = vxpose.xlu0.c.b16.start [1/8] %v1354, 128
        %1359 = vxpose.xlu0.c.b16.cont [2/8] %v1355, 128
        %1360 = vxpose.xlu0.c.b16.cont [3/8] 0, 128
        %1361 = vxpose.xlu0.c.b16.cont [4/8] 0, 128
        %1362 = vxpose.xlu0.c.b16.cont [5/8] 0, 128
        %1363 = vxpose.xlu0.c.b16.cont [6/8] 0, 128
        %1364 = vxpose.xlu0.c.b16.cont [7/8] 0, 128
        %1365 = vxpose.xlu0.c.b16.end [8/8] 0, 128
        %v1366 = vpop.trf.xlu0
        %v1367 = vpop.trf.xlu0
        %v1368 = vpop.trf.xlu0
        %v1369 = vpop.trf.xlu0
        %v1370 = vpop.trf.xlu0
        %v1371 = vpop.trf.xlu0
        %v1372 = vpop.trf.xlu0
        %v1373 = vpop.trf.xlu0
        %v1375 = vsel %vm1076, %v1366, 0
        %1377 = vmatprep.subr.bf16.mxu0 %v1031
        %1378 = vmatpush1.bf16.msra.mxu0 %v1030
        %1379 = vmatprep.subr.bf16.mxu0 %v1033
        %1380 = vmatpush1.bf16.msra.mxu0 %v1032
        %1381 = vmatprep.subr.bf16.mxu0 0
        %1382 = vmatpush1.bf16.msra.mxu0 0
        %1383 = vmatprep.subr.bf16.mxu0 0
        %1384 = vmatpush1.bf16.msra.mxu0 0
        %1385 = vmatprep.subr.bf16.mxu0 0
        %1386 = vmatpush1.bf16.msra.mxu0 0
        %1387 = vmatprep.subr.bf16.mxu0 0
        %1388 = vmatpush1.bf16.msra.mxu0 0
        %1389 = vmatprep.subr.bf16.mxu0 0
        %1390 = vmatpush1.bf16.msra.mxu0 0
        %1391 = vmatprep.subr.bf16.mxu0 0
        %1392 = vmatpush1.bf16.msra.mxu0 0
        %1393 = vmatprep.subr.bf16.mxu0 0
        %1394 = vmatpush1.bf16.msra.mxu0 0
        %1395 = vmatprep.subr.bf16.mxu0 0
        %1396 = vmatpush1.bf16.msra.mxu0 0
        %1397 = vmatprep.subr.bf16.mxu0 0
        %1398 = vmatpush1.bf16.msra.mxu0 0
        %1399 = vmatprep.subr.bf16.mxu0 0
        %1400 = vmatpush1.bf16.msra.mxu0 0
        %1401 = vmatprep.subr.bf16.mxu0 0
        %1402 = vmatpush1.bf16.msra.mxu0 0
        %1403 = vmatprep.subr.bf16.mxu0 0
        %1404 = vmatpush1.bf16.msra.mxu0 0
        %1405 = vmatprep.subr.bf16.mxu0 0
        %1406 = vmatpush1.bf16.msra.mxu0 0
        %1407 = vmatprep.subr.bf16.mxu0 0
        %1408 = vmatpush1.bf16.msra.mxu0 0
        %1409 = vmatprep.mubr.bf16.mxu0 0
        %1410 = vmatmul.mubr.bf16.gmra.mrb[0].mxu0 %v1375
        %v1411 = vpop.f32.mrb[0].mxu0
        %v1412 = vadd.f32 %v1344, %v1411
        %v1413 = vpop.f32.mrb[0].mxu0
        %v1414 = vadd.f32 %v1344, %v1413
        %v1415 = vpop.f32.mrb[0].mxu0
        %v1416 = vpop.f32.mrb[0].mxu0
        %1417 = vdwg.mxu0
        %v1420 = vcombine.low %v1412, %v1414
        %1422 = vst [vmem:[%s637] sm:$0x77] %v1420
        %v1423 = vld [vmem:[%s11] sm:$0xf]
        %v1424 = vld [vmem:[%s11 + $0x4] sm:$0xf]
        %v1425 = vld [vmem:[%s11 + $0x8] sm:$0xf]
        %v1426 = vld [vmem:[%s11 + $0xc] sm:$0xf]
        %v1427 = vld [vmem:[%s12] sm:$0x3]
        %1429 = vset.pattern.permute.xlu0 0
        %1430 = vperm.xlu0 %1429, %v1427
        %v1431 = vpop.permute.xlu0 %1430
        %v1437 = vunpack.c.l.b16 %v1423
        %v1438 = vunpack.c.l.b16 %v1424
        %v1439 = vunpack.c.l.b16 %v1425
        %v1440 = vunpack.c.l.b16 %v1426
        %v1441 = vpack.c.b16 %v1438, %v1437
        %v1442 = vpack.c.b16 %v1440, %v1439
        %1445 = vxpose.xlu0.c.b16.start [1/8] %v1441, 128
        %1446 = vxpose.xlu0.c.b16.cont [2/8] %v1442, 128
        %1447 = vxpose.xlu0.c.b16.cont [3/8] 0, 128
        %1448 = vxpose.xlu0.c.b16.cont [4/8] 0, 128
        %1449 = vxpose.xlu0.c.b16.cont [5/8] 0, 128
        %1450 = vxpose.xlu0.c.b16.cont [6/8] 0, 128
        %1451 = vxpose.xlu0.c.b16.cont [7/8] 0, 128
        %1452 = vxpose.xlu0.c.b16.end [8/8] 0, 128
        %v1453 = vpop.trf.xlu0
        %v1454 = vpop.trf.xlu0
        %v1455 = vpop.trf.xlu0
        %v1456 = vpop.trf.xlu0
        %v1457 = vpop.trf.xlu0
        %v1458 = vpop.trf.xlu0
        %v1459 = vpop.trf.xlu0
        %v1460 = vpop.trf.xlu0
        %v1462 = vsel %vm1076, %v1453, 0
        %1464 = vmatprep.subr.bf16.mxu0 %v1035
        %1465 = vmatpush1.bf16.msra.mxu0 %v1034
        %1466 = vmatprep.subr.bf16.mxu0 %v1037
        %1467 = vmatpush1.bf16.msra.mxu0 %v1036
        %1468 = vmatprep.subr.bf16.mxu0 0
        %1469 = vmatpush1.bf16.msra.mxu0 0
        %1470 = vmatprep.subr.bf16.mxu0 0
        %1471 = vmatpush1.bf16.msra.mxu0 0
        %1472 = vmatprep.subr.bf16.mxu0 0
        %1473 = vmatpush1.bf16.msra.mxu0 0
        %1474 = vmatprep.subr.bf16.mxu0 0
        %1475 = vmatpush1.bf16.msra.mxu0 0
        %1476 = vmatprep.subr.bf16.mxu0 0
        %1477 = vmatpush1.bf16.msra.mxu0 0
        %1478 = vmatprep.subr.bf16.mxu0 0
        %1479 = vmatpush1.bf16.msra.mxu0 0
        %1480 = vmatprep.subr.bf16.mxu0 0
        %1481 = vmatpush1.bf16.msra.mxu0 0
        %1482 = vmatprep.subr.bf16.mxu0 0
        %1483 = vmatpush1.bf16.msra.mxu0 0
        %1484 = vmatprep.subr.bf16.mxu0 0
        %1485 = vmatpush1.bf16.msra.mxu0 0
        %1486 = vmatprep.subr.bf16.mxu0 0
        %1487 = vmatpush1.bf16.msra.mxu0 0
        %1488 = vmatprep.subr.bf16.mxu0 0
        %1489 = vmatpush1.bf16.msra.mxu0 0
        %1490 = vmatprep.subr.bf16.mxu0 0
        %1491 = vmatpush1.bf16.msra.mxu0 0
        %1492 = vmatprep.subr.bf16.mxu0 0
        %1493 = vmatpush1.bf16.msra.mxu0 0
        %1494 = vmatprep.subr.bf16.mxu0 0
        %1495 = vmatpush1.bf16.msra.mxu0 0
        %1496 = vmatprep.mubr.bf16.mxu0 0
        %1497 = vmatmul.mubr.bf16.gmra.mrb[0].mxu0 %v1462
        %v1498 = vpop.f32.mrb[0].mxu0
        %v1499 = vadd.f32 %v1431, %v1498
        %v1500 = vpop.f32.mrb[0].mxu0
        %v1501 = vadd.f32 %v1431, %v1500
        %v1502 = vpop.f32.mrb[0].mxu0
        %v1503 = vpop.f32.mrb[0].mxu0
        %1504 = vdwg.mxu0
        %v1507 = vcombine.low %v1499, %v1501
        %v1509 = vunpack.c.l.s4 1983009808
        %v1510 = vunpack.c.0.s8 %v1509
        %v1511 = vlaneseq
        %v1512 = vshrl.u32 %v1511, 7
        %v1513 = vsub.s32 %v1510, %v1512
        %v1514 = vrot.slane %v1507, %v1513
        %1516 = vst [vmem:[%s615] sm:$0xf] %v1514
        %s1517 = sand.u32 %s342, 1
        %s1518 = scalar_lea.sflag [#allocation4], %s1517
        %s1519 = sand.u32 %s342, 1
        %s1520 = smul.addr %s1519, 4
        %s1521 = scalar_lea.vmem [#allocation3], %s1520
        %s1522 = sand.u32 %s40, 1
        %s1523 = scalar_lea.sflag [#allocation6], %s1522
        %s1524 = sand.u32 %s370, 1
        %s1525 = smul.addr %s1524, 4
        %s1526 = scalar_lea.vmem [#allocation5], %s1525
        %s1527 = sand.u32 %s40, 1
        %s1528 = scalar_lea.sflag [#allocation6], %s1527
        %s1529 = sand.u32 %s398, 1
        %s1530 = smul.addr %s1529, 2
        %s1531 = scalar_lea.vmem [#allocation7], %s1530
        %s1532 = smul.u32 2, %s45
        %p1533 = scmp.lt.s32.totalorder %s44, 1
        %s1534 = scalar_select %p1533, %s44, 1
        %p1535 = scmp.lt.s32.totalorder %s1532, 1
        %s1536 = scalar_select %p1535, %s1532, 1
        %s1537 = smul.addr %s1534, 2
        %s1538 = sadd.s32 %s1536, %s1537
        %s1539 = smul.addr %s1538, 4
        %s1540 = scalar_lea.vmem %s16, %s1539
        %s1541 = sand.u32 %s454, 1
        %s1542 = scalar_lea.sflag [#allocation9], %s1541
        %s1543 = sand.u32 %s454, 1
        %s1544 = smul.addr %s1543, 4
        %s1545 = scalar_lea.vmem [#allocation8], %s1544
        // Predicated region
        $region73: #{tpu_custom_call.1} parent=71 // pred_check
          %p1546 = pneg %p352
        $region74: #{tpu_custom_call.1} parent=71 // pred_check_branch
          %1548 = sbr.rel (%p1546) target = $region76
        $region75: #{tpu_custom_call.1} parent=71 // pred_region
          %s1549 = smul.u32 2, %s45
          %s1551 = ssub.s32 64, 64
          %1552 = vsyncadd %s1518, %s1551
          %s1553 = smul.addr %s44, 2
          %s1554 = sadd.s32 %s1549, %s1553
          %s1555 = smul.addr %s1554, 32
          %s1556 = scalar_lea.hbm %s13, %s1555
          %s1558 = sshll.u32 %s1521, 4
          %s1559 = int_to_ptr.vmem [resolvable:$true] %s1558
          %1561 = dma.vmem_to_hbm [thread:$0]  %s1559, 64, %s1556, %s1518
        $region76: #{tpu_custom_call.1} parent=71 // pred_fallthru
          _
        // Predicated region
        $region77: #{tpu_custom_call.1} parent=71 // pred_check
          %p1562 = pneg %p380
        $region78: #{tpu_custom_call.1} parent=71 // pred_check_branch
          %1564 = sbr.rel (%p1562) target = $region80
        $region79: #{tpu_custom_call.1} parent=71 // pred_region
          %s1565 = smul.u32 2, %s45
          %s1567 = ssub.s32 64, 64
          %1568 = vsyncadd %s1523, %s1567
          %s1569 = smul.addr %s44, 2
          %s1570 = sadd.s32 %s1565, %s1569
          %s1571 = smul.addr %s1570, 32
          %s1572 = scalar_lea.hbm %s14, %s1571
          %s1574 = sshll.u32 %s1526, 4
          %s1575 = int_to_ptr.vmem [resolvable:$true] %s1574
          %1577 = dma.vmem_to_hbm [thread:$0]  %s1575, 64, %s1572, %s1523
        $region80: #{tpu_custom_call.1} parent=71 // pred_fallthru
          _
        // Predicated region
        $region81: #{tpu_custom_call.1} parent=71 // pred_check
          %p1578 = pneg %p408
        $region82: #{tpu_custom_call.1} parent=71 // pred_check_branch
          %1580 = sbr.rel (%p1578) target = $region84
        $region83: #{tpu_custom_call.1} parent=71 // pred_region
          %s1581 = smul.u32 2, %s45
          %s1583 = ssub.s32 32, 32
          %1584 = vsyncadd %s1528, %s1583
          %s1585 = smul.addr %s44, 2
          %s1586 = sadd.s32 %s1581, %s1585
          %s1587 = smul.addr %s1586, 16
          %s1588 = scalar_lea.hbm %s15, %s1587
          %s1590 = sshll.u32 %s1531, 4
          %s1591 = int_to_ptr.vmem [resolvable:$true] %s1590
          %1593 = dma.vmem_to_hbm [thread:$0]  %s1591, 32, %s1588, %s1528
        $region84: #{tpu_custom_call.1} parent=71 // pred_fallthru
          _
        // Predicated region
        $region85: #{tpu_custom_call.1} parent=71 // pred_check
          %p1594 = pneg %p436
        $region86: #{tpu_custom_call.1} parent=71 // pred_check_branch
          %1596 = sbr.rel (%p1594) target = $region88
        $region87: #{tpu_custom_call.1} parent=71 // pred_region
          %s1597 = smul.u32 2, %s45
        $region88: #{tpu_custom_call.1} parent=71 // pred_fallthru
          _
        // Predicated region
        $region89: #{tpu_custom_call.1} parent=71 // pred_check
          %p1598 = pneg %p464
        $region90: #{tpu_custom_call.1} parent=71 // pred_check_branch
          %1600 = sbr.rel (%p1598) target = $region92
        $region91: #{tpu_custom_call.1} parent=71 // pred_region
          %s1601 = smul.u32 2, %s45
          %s1603 = ssub.s32 64, 64
          %1604 = vsyncadd %s1542, %s1603
          %s1605 = smul.addr %s44, 2
          %s1606 = sadd.s32 %s1601, %s1605
          %s1607 = smul.addr %s1606, 32
          %s1608 = scalar_lea.hbm %s17, %s1607
          %s1610 = sshll.u32 %s1545, 4
          %s1611 = int_to_ptr.vmem [resolvable:$true] %s1610
          %1613 = dma.vmem_to_hbm [thread:$0]  %s1611, 64, %s1608, %s1542
        $region92: #{tpu_custom_call.1} parent=71 // pred_fallthru
          _
      $region72: #{tpu_custom_call.1} parent=5 // pred_fallthru
        _
      %p1614 = scmp.le.s32.totalorder 2, %s35
      // Predicated region
      $region93: #{tpu_custom_call.1} parent=5 // pred_check
        %p1615 = pneg %p1614
      $region94: #{tpu_custom_call.1} parent=5 // pred_check_branch
        %1617 = sbr.rel (%p1615) target = $region96
      $region95: #{tpu_custom_call.1} parent=5 // pred_region
        %s1618 = ssub.s32 %s35, 2
        // Predicated region
        $region97: #{tpu_custom_call.1} parent=95 // pred_check
          %p1619 = pneg %p358
        $region98: #{tpu_custom_call.1} parent=95 // pred_check_branch
          %1621 = sbr.rel (%p1619) target = $region100
        $region99: #{tpu_custom_call.1} parent=95 // pred_region
          %s1622 = sand.u32 %s343, 1
          %s1623 = scalar_lea.sflag [#allocation4], %s1622
          %s1624 = sand.u32 %s343, 1
          %s1625 = smul.addr %s1624, 4
          %s1626 = scalar_lea.vmem [#allocation3], %s1625
          %1627 = dma.done %s1623, 64
        $region100: #{tpu_custom_call.1} parent=95 // pred_fallthru
          _
        // Predicated region
        $region101: #{tpu_custom_call.1} parent=95 // pred_check
          %p1628 = pneg %p386
        $region102: #{tpu_custom_call.1} parent=95 // pred_check_branch
          %1630 = sbr.rel (%p1628) target = $region104
        $region103: #{tpu_custom_call.1} parent=95 // pred_region
          %s1631 = sand.u32 %s41, 1
          %s1632 = scalar_lea.sflag [#allocation6], %s1631
          %s1633 = sand.u32 %s371, 1
          %s1634 = smul.addr %s1633, 4
          %s1635 = scalar_lea.vmem [#allocation5], %s1634
          %1636 = dma.done %s1632, 64
        $region104: #{tpu_custom_call.1} parent=95 // pred_fallthru
          _
        // Predicated region
        $region105: #{tpu_custom_call.1} parent=95 // pred_check
          %p1637 = pneg %p414
        $region106: #{tpu_custom_call.1} parent=95 // pred_check_branch
          %1639 = sbr.rel (%p1637) target = $region108
        $region107: #{tpu_custom_call.1} parent=95 // pred_region
          %s1640 = sand.u32 %s41, 1
          %s1641 = scalar_lea.sflag [#allocation6], %s1640
          %s1642 = sand.u32 %s399, 1
          %s1643 = smul.addr %s1642, 2
          %s1644 = scalar_lea.vmem [#allocation7], %s1643
          %1645 = dma.done %s1641, 32
        $region108: #{tpu_custom_call.1} parent=95 // pred_fallthru
          _
        // Predicated region
        $region109: #{tpu_custom_call.1} parent=95 // pred_check
          %p1646 = pneg %p442
        $region110: #{tpu_custom_call.1} parent=95 // pred_check_branch
          %1648 = sbr.rel (%p1646) target = $region112
        $region111: #{tpu_custom_call.1} parent=95 // pred_region
          %s1649 = smul.u32 2, %s47
          %p1650 = scmp.lt.s32.totalorder %s46, 1
          %s1651 = scalar_select %p1650, %s46, 1
          %p1652 = scmp.lt.s32.totalorder %s1649, 1
          %s1653 = scalar_select %p1652, %s1649, 1
          %s1654 = smul.addr %s1651, 2
          %s1655 = sadd.s32 %s1653, %s1654
          %s1656 = smul.addr %s1655, 4
          %s1657 = scalar_lea.vmem %s16, %s1656
        $region112: #{tpu_custom_call.1} parent=95 // pred_fallthru
          _
        // Predicated region
        $region113: #{tpu_custom_call.1} parent=95 // pred_check
          %p1658 = pneg %p470
        $region114: #{tpu_custom_call.1} parent=95 // pred_check_branch
          %1660 = sbr.rel (%p1658) target = $region116
        $region115: #{tpu_custom_call.1} parent=95 // pred_region
          %s1661 = sand.u32 %s455, 1
          %s1662 = scalar_lea.sflag [#allocation9], %s1661
          %s1663 = sand.u32 %s455, 1
          %s1664 = smul.addr %s1663, 4
          %s1665 = scalar_lea.vmem [#allocation8], %s1664
          %1666 = dma.done %s1662, 64
        $region116: #{tpu_custom_call.1} parent=95 // pred_fallthru
          _
      $region96: #{tpu_custom_call.1} parent=5 // pred_fallthru
        _
    $region6: #{tpu_custom_call.1} parent=1 // loop_footer
      %s39 = sadd.s32 1, %s35
    $region7: #{tpu_custom_call.1} parent=1 // loop_footer_branch
      %34 = sbr.rel target = $region3
    $region8: #{tpu_custom_call.1} parent=1 // loop_exit
      _
    %1667 = vsyncpa [#allocation4], 1
    %s1668 = scalar_lea.sflag [#allocation4], 1
    %1669 = vsyncpa %s1668, 1
    %1670 = vsyncpa [#allocation6], 1
    %s1671 = scalar_lea.sflag [#allocation6], 1
    %1672 = vsyncpa %s1671, 1
    %1673 = vsyncpa [#allocation9], 1
    %s1674 = scalar_lea.sflag [#allocation9], 1
    %1675 = vsyncpa %s1674, 1

</llo_original>
